<compile_context>
chip_gen: v7x
topology: tpu7x:2x2x1
jax: 0.10.0
libtpu: 0.0.40
codegen_flags: <defaults>
</compile_context>

<pallas_src>
import functools
import math

import jax
import jax.numpy as jnp
from jax.experimental import pallas as pl
from jax.experimental.pallas import tpu as pltpu


def _flash_attn_kernel(q_ref, k_ref, v_ref, wo_ref, bo_ref, *refs,
                       n_heads, n_kv, tk, with_weights):
    if with_weights:
        z_ref, wn_ref, m_sc, l_sc, acc_sc, p_sc, mh_sc = refs
    else:
        z_ref, m_sc, l_sc, acc_sc = refs

    ki = pl.program_id(2)
    cdt = q_ref.dtype                       # MXU input dtype (f32 or bf16)

    @pl.when(ki == 0)
    def _init():
        m_sc[...] = jnp.full(m_sc.shape, -jnp.inf, dtype=m_sc.dtype)
        l_sc[...] = jnp.zeros(l_sc.shape, dtype=l_sc.dtype)
        acc_sc[...] = jnp.zeros(acc_sc.shape, dtype=acc_sc.dtype)

    # Head-batched scores; 1/sqrt(head_dim) already folded into Q.
    s = jnp.einsum("hqd,hkd->hqk", q_ref[...], k_ref[...],
                   preferred_element_type=jnp.float32)          # (H, TQ, TK)

    m_prev = m_sc[...]                                          # (H, TQ, 1)
    m_new = jnp.maximum(m_prev, jnp.max(s, axis=-1, keepdims=True))
    alpha = jnp.exp(m_prev - m_new)                             # (H, TQ, 1)
    p = jnp.exp(s - m_new)                                      # (H, TQ, TK)

    l_sc[...] = alpha * l_sc[...] + jnp.sum(p, axis=-1, keepdims=True)
    acc_sc[...] = alpha * acc_sc[...] + jnp.einsum(
        "hqk,hkd->hqd", p.astype(cdt), v_ref[...],
        preferred_element_type=jnp.float32)
    m_sc[...] = m_new

    if with_weights:
        # Deferred correction: store only the raw block + the running max.
        p_sc[ki] = p
        mh_sc[ki] = m_new

    @pl.when(ki == pl.num_programs(2) - 1)
    def _finalize():
        # EUP reciprocal seed + one Newton step: no full-tile VPU divides.
        l = l_sc[...]
        inv_l = pl.reciprocal(l, approx=True)
        inv_l = inv_l * (2.0 - l * inv_l)                       # (H, TQ, 1)

        o = acc_sc[...] * inv_l                                 # (H, TQ, hd)
        # Merge heads once per query tile, then one (TQ, D) x (D, D) matmul.
        v2 = jnp.concatenate([o[h] for h in range(n_heads)], axis=-1)
        z = jnp.dot(v2.astype(cdt), wo_ref[...],
                    preferred_element_type=jnp.float32) + bo_ref[...]
        z_ref[...] = z.astype(z_ref.dtype)

        if with_weights:
            m_final = m_sc[...]                                 # (H, TQ, 1)
            inv_h = 1.0 / n_heads
            for j in range(n_kv):                               # static loop
                corr = jnp.exp(mh_sc[j] - m_final) * inv_l      # (H, TQ, 1)
                w_j = jnp.sum(p_sc[j] * corr, axis=0) * inv_h   # (TQ, TK)
                wn_ref[:, pl.ds(j * tk, tk)] = w_j.astype(wn_ref.dtype)


def multi_headed_attention(x, params, *, n_heads, q_tile=None, kv_tile=None,
                           compute_dtype=None, weights_dtype=None,
                           return_weights=True, vmem_limit_bytes=None):
    """x: (B, S, D).  params: wq,bq,wk,bk,wv,bv,wo,bo with (D,D)/(1,D) shapes
    (weights pre-transposed so y = x @ W + b).  Returns (Z, weights_norm);
    weights_norm is omitted when return_weights=False."""
    B, S, D = x.shape
    assert D % n_heads == 0
    head_dim = D // n_heads
    inv_scale = 1.0 / math.sqrt(float(head_dim))

    # Tile defaults: 128 is safe everywhere; on v6e/v5e (128 MiB VMEM) raise
    # kv_tile to 256-512 (and q_tile to 256) to better fill the MXU and
    # amortize per-step overhead, especially with return_weights=False.
    tq = q_tile if q_tile is not None else min(S, 128)
    tk = kv_tile if kv_tile is not None else min(S, 128)
    assert S % tq == 0 and S % tk == 0
    n_q, n_kv = S // tq, S // tk

    cdt = jnp.dtype(compute_dtype) if compute_dtype is not None else x.dtype
    wdt = jnp.dtype(weights_dtype) if weights_dtype is not None else x.dtype

    # ---- QKV projections hoisted out of the kv grid axis: one fused -------
    # ---- (B*S, D) x (D, 3D) matmul; 1/sqrt(head_dim) folded into Wq/bq. ---
    w_qkv = jnp.concatenate(
        [params["wq"] * inv_scale, params["wk"], params["wv"]],
        axis=1).astype(cdt)                                     # (D, 3D)
    b_qkv = jnp.concatenate(
        [params["bq"] * inv_scale, params["bk"], params["bv"]],
        axis=1).astype(jnp.float32)                             # (1, 3D)
    qkv = jnp.dot(x.reshape(B * S, D).astype(cdt), w_qkv,
                  preferred_element_type=jnp.float32) + b_qkv   # (B*S, 3D)

    def to_heads(t):  # (B*S, D) -> head-major (B, H, S, head_dim), cdt
        return (t.reshape(B, S, n_heads, head_dim)
                 .transpose(0, 2, 1, 3).astype(cdt))

    qh = to_heads(qkv[:, :D])
    kh = to_heads(qkv[:, D:2 * D])
    vh = to_heads(qkv[:, 2 * D:])
    wo = params["wo"].astype(cdt)
    bo = params["bo"].astype(jnp.float32)

    kernel = functools.partial(
        _flash_attn_kernel, n_heads=n_heads, n_kv=n_kv, tk=tk,
        with_weights=return_weights)

    q_spec = pl.BlockSpec((None, n_heads, tq, head_dim),
                          lambda b, qi, ki: (b, 0, qi, 0))
    kv_spec = pl.BlockSpec((None, n_heads, tk, head_dim),
                           lambda b, qi, ki: (b, 0, ki, 0))
    # Constant-index blocks stay VMEM resident across the whole grid.
    # TODO(synk): on v7x with large D, add pipeline_mode=pl.Buffered(1) and
    # bf16 weights here to avoid double-buffering the resident Wo block.
    wo_spec = pl.BlockSpec((D, D), lambda b, qi, ki: (0, 0))
    bo_spec = pl.BlockSpec((1, D), lambda b, qi, ki: (0, 0))

    z_spec = pl.BlockSpec((None, tq, D), lambda b, qi, ki: (b, qi, 0))
    z_shape = jax.ShapeDtypeStruct((B, S, D), x.dtype)

    scratch = [
        pltpu.VMEM((n_heads, tq, 1), jnp.float32),          # running max
        pltpu.VMEM((n_heads, tq, 1), jnp.float32),          # running denom
        pltpu.VMEM((n_heads, tq, head_dim), jnp.float32),   # output accumulator
    ]

    if return_weights:
        out_shape = (z_shape, jax.ShapeDtypeStruct((B, S, S), wdt))
        out_specs = (z_spec,
                     pl.BlockSpec((None, tq, S), lambda b, qi, ki: (b, qi, 0)))
        scratch += [
            pltpu.VMEM((n_kv, n_heads, tq, tk), jnp.float32),  # raw prob blocks
            pltpu.VMEM((n_kv, n_heads, tq, 1), jnp.float32),   # running-max history
        ]
    else:
        out_shape = z_shape
        out_specs = z_spec

    if vmem_limit_bytes is None:
        try:
            cap = pltpu.get_tpu_info().vmem_capacity_bytes
        except Exception:
            cap = 128 * 1024 * 1024
        # ~25% headroom for compiler scratch / output double-buffers
        # (v7x: ~48 MiB of 64; v5e/v6e: ~96 MiB of 128).
        vmem_limit_bytes = min(cap * 3 // 4, 100 * 1024 * 1024)

    out = pl.pallas_call(
        kernel,
        out_shape=out_shape,
        grid_spec=pltpu.PrefetchScalarGridSpec(
            num_scalar_prefetch=0,
            grid=(B, n_q, n_kv),
            in_specs=[q_spec, kv_spec, kv_spec, wo_spec, bo_spec],
            out_specs=out_specs,
            scratch_shapes=scratch,
        ),
        compiler_params=pltpu.CompilerParams(
            dimension_semantics=("parallel", "parallel", "arbitrary"),
            vmem_limit_bytes=int(vmem_limit_bytes),
        ),
    )(qh, kh, vh, wo, bo)

    return out


def _reference(x, params, n_heads):
    """Pure-JAX reference mirroring the PyTorch forward (eval, mask=None)."""
    B, S, D = x.shape
    hd = D // n_heads
    scale = math.sqrt(float(hd))

    def proj(w, b):
        return x @ w + b

    q = proj(params["wq"], params["bq"]).reshape(B, S, n_heads, hd).transpose(0, 2, 1, 3)
    k = proj(params["wk"], params["bk"]).reshape(B, S, n_heads, hd).transpose(0, 2, 1, 3)
    v = proj(params["wv"], params["bv"]).reshape(B, S, n_heads, hd).transpose(0, 2, 1, 3)

    scores = jnp.einsum("bhqd,bhkd->bhqk", q, k) / scale
    w = jax.nn.softmax(scores, axis=-1)
    v1 = jnp.einsum("bhqk,bhkd->bhqd", w, v)
    v2 = v1.transpose(0, 2, 1, 3).reshape(B, S, D)
    z = v2 @ params["wo"] + params["bo"]
    wn = jnp.sum(w, axis=1) / n_heads
    return z, wn


def _run_case(B, S, D, H, tq, tk, key):
    ks = jax.random.split(key, 9)
    bound = 1.0 / math.sqrt(D)     # nn.Linear-style uniform init, deterministic
    params = {
        "wq": jax.random.uniform(ks[0], (D, D), jnp.float32, -bound, bound),
        "bq": jax.random.uniform(ks[1], (1, D), jnp.float32, -bound, bound),
        "wk": jax.random.uniform(ks[2], (D, D), jnp.float32, -bound, bound),
        "bk": jax.random.uniform(ks[3], (1, D), jnp.float32, -bound, bound),
        "wv": jax.random.uniform(ks[4], (D, D), jnp.float32, -bound, bound),
        "bv": jax.random.uniform(ks[5], (1, D), jnp.float32, -bound, bound),
        "wo": jax.random.uniform(ks[6], (D, D), jnp.float32, -bound, bound),
        "bo": jax.random.uniform(ks[7], (1, D), jnp.float32, -bound, bound),
    }
    x = jax.random.normal(ks[8], (B, S, D), jnp.float32)

    # f32 demo (use compute_dtype=jnp.bfloat16 on v6e/v7x for MXU throughput).
    z, wn = multi_headed_attention(x, params, n_heads=H, q_tile=tq, kv_tile=tk)
    jax.block_until_ready((z, wn))

    z_ref, wn_ref = _reference(x, params, H)
    assert jnp.allclose(z, z_ref, atol=1e-3, rtol=1e-3), f"Z mismatch @ {(B, S, D, H)}"
    assert jnp.allclose(wn, wn_ref, atol=1e-4, rtol=1e-3), \
        f"weights_normalization mismatch @ {(B, S, D, H)}"


if __name__ == "__main__":
    key = jax.random.PRNGKey(0)
    k1, k2 = jax.random.split(key)
    # Tiny case: 2x2 tiles, exercises the online softmax / deferred correction.
    _run_case(B=2, S=16, D=32, H=4, tq=8, tk=8, key=k1)
    # 128x128-tile case: exercises the real (8,128) lane-tiled layout path.
    _run_case(B=2, S=256, D=128, H=4, tq=128, tk=128, key=k2)
    print("KERNEL_OK")
</pallas_src>

<mosaic_0001>
module attributes {stable_mosaic.version = 11 : i64} {
  func.func @_flash_attn_kernel(%arg0: i32, %arg1: i32, %arg2: i32, %arg3: memref<1x4x8x8xf32, #tpu.memory_space<vmem>>, %arg4: memref<1x4x8x8xf32, #tpu.memory_space<vmem>>, %arg5: memref<1x4x8x8xf32, #tpu.memory_space<vmem>>, %arg6: memref<32x32xf32, #tpu.memory_space<vmem>>, %arg7: memref<1x32xf32, #tpu.memory_space<vmem>>, %arg8: memref<1x8x32xf32, #tpu.memory_space<vmem>>, %arg9: memref<1x8x16xf32, #tpu.memory_space<vmem>>, %arg10: memref<4x8x1xf32, #tpu.memory_space<vmem>>, %arg11: memref<4x8x1xf32, #tpu.memory_space<vmem>>, %arg12: memref<4x8x8xf32, #tpu.memory_space<vmem>>, %arg13: memref<2x4x8x8xf32, #tpu.memory_space<vmem>>, %arg14: memref<2x4x8x1xf32, #tpu.memory_space<vmem>>) attributes {dimension_semantics = [#tpu.dimension_semantics<parallel>, #tpu.dimension_semantics<parallel>, #tpu.dimension_semantics<arbitrary>], iteration_bounds = array<i64: 2, 2, 2>, scalar_prefetch = 0 : i64, scratch_operands = 5 : i64, tpu.core_type = #tpu.core_type<tc>, window_params = [{transform_indices = @transform_0, window_bounds = array<i64: 1, 4, 8, 8>}, {transform_indices = @transform_1, window_bounds = array<i64: 1, 4, 8, 8>}, {transform_indices = @transform_2, window_bounds = array<i64: 1, 4, 8, 8>}, {pipeline_mode = #tpu.pipeline_mode<synchronous>, transform_indices = @transform_3, window_bounds = array<i64: 32, 32>}, {pipeline_mode = #tpu.pipeline_mode<synchronous>, transform_indices = @transform_4, window_bounds = array<i64: 1, 32>}, {transform_indices = @transform_5, window_bounds = array<i64: 1, 8, 32>}, {transform_indices = @transform_6, window_bounds = array<i64: 1, 8, 16>}]} {
    %c0_i32 = arith.constant 0 : i32
    %0 = arith.cmpi eq, %arg2, %c0_i32 : i32
    %1 = arith.extui %0 : i1 to i32
    %c0_i32_0 = arith.constant 0 : i32
    %2 = arith.cmpi ne, %1, %c0_i32_0 : i32
    scf.if %2 {
      %cst_40 = arith.constant 0xFF800000 : f32
      %43 = vector.broadcast %cst_40 : f32 to vector<4x8x1xf32>
      %c0_41 = arith.constant 0 : index
      %c0_42 = arith.constant 0 : index
      %c0_43 = arith.constant 0 : index
      %44 = vector.load %arg10[%c0_41, %c0_42, %c0_43] : memref<4x8x1xf32, #tpu.memory_space<vmem>>, vector<4x8x1xf32>
      tpu.vector_store %arg10[%c0_41, %c0_42, %c0_43], %43 {strides = array<i32>} : memref<4x8x1xf32, #tpu.memory_space<vmem>>, vector<4x8x1xf32>,
      %cst_44 = arith.constant 0.000000e+00 : f32
      %45 = vector.broadcast %cst_44 : f32 to vector<4x8x1xf32>
      %c0_45 = arith.constant 0 : index
      %c0_46 = arith.constant 0 : index
      %c0_47 = arith.constant 0 : index
      %46 = vector.load %arg11[%c0_45, %c0_46, %c0_47] : memref<4x8x1xf32, #tpu.memory_space<vmem>>, vector<4x8x1xf32>
      tpu.vector_store %arg11[%c0_45, %c0_46, %c0_47], %45 {strides = array<i32>} : memref<4x8x1xf32, #tpu.memory_space<vmem>>, vector<4x8x1xf32>,
      %cst_48 = arith.constant 0.000000e+00 : f32
      %47 = vector.broadcast %cst_48 : f32 to vector<4x8x8xf32>
      %c0_49 = arith.constant 0 : index
      %c0_50 = arith.constant 0 : index
      %c0_51 = arith.constant 0 : index
      %48 = vector.load %arg12[%c0_49, %c0_50, %c0_51] : memref<4x8x8xf32, #tpu.memory_space<vmem>>, vector<4x8x8xf32>
      tpu.vector_store %arg12[%c0_49, %c0_50, %c0_51], %47 {strides = array<i32>} : memref<4x8x8xf32, #tpu.memory_space<vmem>>, vector<4x8x8xf32>,
    } else {
    }
    %c0 = arith.constant 0 : index
    %c0_1 = arith.constant 0 : index
    %c0_2 = arith.constant 0 : index
    %c0_3 = arith.constant 0 : index
    %3 = vector.load %arg3[%c0, %c0_1, %c0_2, %c0_3] : memref<1x4x8x8xf32, #tpu.memory_space<vmem>>, vector<1x4x8x8xf32>
    %4 = vector.shape_cast %3 : vector<1x4x8x8xf32> to vector<4x8x8xf32>
    %c0_4 = arith.constant 0 : index
    %c0_5 = arith.constant 0 : index
    %c0_6 = arith.constant 0 : index
    %c0_7 = arith.constant 0 : index
    %5 = vector.load %arg4[%c0_4, %c0_5, %c0_6, %c0_7] : memref<1x4x8x8xf32, #tpu.memory_space<vmem>>, vector<1x4x8x8xf32>
    %6 = vector.shape_cast %5 : vector<1x4x8x8xf32> to vector<4x8x8xf32>
    "tpu.trace_start"() <{level = 10 : i32, message = "hqd,hkd->hqk"}> : () -> ()
    %cst = arith.constant dense<0.000000e+00> : vector<4x8x8xf32>
    %7 = tpu.matmul %4, %6, %cst {dimension_numbers = #tpu.dot_dimension_numbers<[2], [2], [1], [1], [0, 0, 0, 1, 1, 1], [0], [0]>} : vector<4x8x8xf32>, vector<4x8x8xf32>, vector<4x8x8xf32> -> vector<4x8x8xf32>
    "tpu.trace_stop"() : () -> ()
    %c0_8 = arith.constant 0 : index
    %c0_9 = arith.constant 0 : index
    %c0_10 = arith.constant 0 : index
    %8 = vector.load %arg10[%c0_8, %c0_9, %c0_10] : memref<4x8x1xf32, #tpu.memory_space<vmem>>, vector<4x8x1xf32>
    %cst_11 = arith.constant dense<0xFF800000> : vector<4x8xf32>
    %9 = vector.multi_reduction <maximumf>, %7, %cst_11 [2] : vector<4x8x8xf32> to vector<4x8xf32>
    %10 = vector.shape_cast %9 : vector<4x8xf32> to vector<4x8x1xf32>
    %11 = arith.maximumf %8, %10 : vector<4x8x1xf32>
    %12 = arith.subf %8, %11 : vector<4x8x1xf32>
    %13 = math.exp %12 : vector<4x8x1xf32>
    %14 = vector.broadcast %11 : vector<4x8x1xf32> to vector<4x8x8xf32>
    %15 = arith.subf %7, %14 : vector<4x8x8xf32>
    %16 = math.exp %15 : vector<4x8x8xf32>
    %c0_12 = arith.constant 0 : index
    %c0_13 = arith.constant 0 : index
    %c0_14 = arith.constant 0 : index
    %17 = vector.load %arg11[%c0_12, %c0_13, %c0_14] : memref<4x8x1xf32, #tpu.memory_space<vmem>>, vector<4x8x1xf32>
    %18 = arith.mulf %13, %17 : vector<4x8x1xf32>
    %cst_15 = arith.constant dense<0.000000e+00> : vector<4x8xf32>
    %19 = vector.multi_reduction <add>, %16, %cst_15 [2] : vector<4x8x8xf32> to vector<4x8xf32>
    %20 = vector.shape_cast %19 : vector<4x8xf32> to vector<4x8x1xf32>
    %21 = arith.addf %18, %20 : vector<4x8x1xf32>
    %c0_16 = arith.constant 0 : index
    %c0_17 = arith.constant 0 : index
    %c0_18 = arith.constant 0 : index
    %22 = vector.load %arg11[%c0_16, %c0_17, %c0_18] : memref<4x8x1xf32, #tpu.memory_space<vmem>>, vector<4x8x1xf32>
    tpu.vector_store %arg11[%c0_16, %c0_17, %c0_18], %21 {strides = array<i32>} : memref<4x8x1xf32, #tpu.memory_space<vmem>>, vector<4x8x1xf32>,
    %c0_19 = arith.constant 0 : index
    %c0_20 = arith.constant 0 : index
    %c0_21 = arith.constant 0 : index
    %23 = vector.load %arg12[%c0_19, %c0_20, %c0_21] : memref<4x8x8xf32, #tpu.memory_space<vmem>>, vector<4x8x8xf32>
    %24 = vector.broadcast %13 : vector<4x8x1xf32> to vector<4x8x8xf32>
    %25 = arith.mulf %24, %23 : vector<4x8x8xf32>
    %c0_22 = arith.constant 0 : index
    %c0_23 = arith.constant 0 : index
    %c0_24 = arith.constant 0 : index
    %c0_25 = arith.constant 0 : index
    %26 = vector.load %arg5[%c0_22, %c0_23, %c0_24, %c0_25] : memref<1x4x8x8xf32, #tpu.memory_space<vmem>>, vector<1x4x8x8xf32>
    %27 = vector.shape_cast %26 : vector<1x4x8x8xf32> to vector<4x8x8xf32>
    "tpu.trace_start"() <{level = 10 : i32, message = "hqk,hkd->hqd"}> : () -> ()
    %cst_26 = arith.constant dense<0.000000e+00> : vector<4x8x8xf32>
    %28 = tpu.matmul %16, %27, %cst_26 {dimension_numbers = #tpu.dot_dimension_numbers<[2], [1], [1], [2], [0, 0, 0, 1, 1, 2], [0], [0]>} : vector<4x8x8xf32>, vector<4x8x8xf32>, vector<4x8x8xf32> -> vector<4x8x8xf32>
    "tpu.trace_stop"() : () -> ()
    %29 = arith.addf %25, %28 : vector<4x8x8xf32>
    %c0_27 = arith.constant 0 : index
    %c0_28 = arith.constant 0 : index
    %c0_29 = arith.constant 0 : index
    %30 = vector.load %arg12[%c0_27, %c0_28, %c0_29] : memref<4x8x8xf32, #tpu.memory_space<vmem>>, vector<4x8x8xf32>
    tpu.vector_store %arg12[%c0_27, %c0_28, %c0_29], %29 {strides = array<i32>} : memref<4x8x8xf32, #tpu.memory_space<vmem>>, vector<4x8x8xf32>,
    %c0_30 = arith.constant 0 : index
    %c0_31 = arith.constant 0 : index
    %c0_32 = arith.constant 0 : index
    %31 = vector.load %arg10[%c0_30, %c0_31, %c0_32] : memref<4x8x1xf32, #tpu.memory_space<vmem>>, vector<4x8x1xf32>
    tpu.vector_store %arg10[%c0_30, %c0_31, %c0_32], %11 {strides = array<i32>} : memref<4x8x1xf32, #tpu.memory_space<vmem>>, vector<4x8x1xf32>,
    %32 = arith.index_cast %arg2 : i32 to index
    %c0_33 = arith.constant 0 : index
    %c0_34 = arith.constant 0 : index
    %c0_35 = arith.constant 0 : index
    %33 = vector.load %arg13[%32, %c0_33, %c0_34, %c0_35] : memref<2x4x8x8xf32, #tpu.memory_space<vmem>>, vector<1x4x8x8xf32>
    %34 = vector.shape_cast %33 : vector<1x4x8x8xf32> to vector<4x8x8xf32>
    %35 = vector.shape_cast %16 : vector<4x8x8xf32> to vector<1x4x8x8xf32>
    tpu.vector_store %arg13[%32, %c0_33, %c0_34, %c0_35], %35 {strides = array<i32>} : memref<2x4x8x8xf32, #tpu.memory_space<vmem>>, vector<1x4x8x8xf32>,
    %36 = arith.index_cast %arg2 : i32 to index
    %c0_36 = arith.constant 0 : index
    %c0_37 = arith.constant 0 : index
    %c0_38 = arith.constant 0 : index
    %37 = vector.load %arg14[%36, %c0_36, %c0_37, %c0_38] : memref<2x4x8x1xf32, #tpu.memory_space<vmem>>, vector<1x4x8x1xf32>
    %38 = vector.shape_cast %37 : vector<1x4x8x1xf32> to vector<4x8x1xf32>
    %39 = vector.shape_cast %11 : vector<4x8x1xf32> to vector<1x4x8x1xf32>
    tpu.vector_store %arg14[%36, %c0_36, %c0_37, %c0_38], %39 {strides = array<i32>} : memref<2x4x8x1xf32, #tpu.memory_space<vmem>>, vector<1x4x8x1xf32>,
    %c1_i32 = arith.constant 1 : i32
    %40 = arith.cmpi eq, %arg2, %c1_i32 : i32
    %41 = arith.extui %40 : i1 to i32
    %c0_i32_39 = arith.constant 0 : i32
    %42 = arith.cmpi ne, %41, %c0_i32_39 : i32
    scf.if %42 {
      %c0_40 = arith.constant 0 : index
      %c0_41 = arith.constant 0 : index
      %c0_42 = arith.constant 0 : index
      %43 = vector.load %arg11[%c0_40, %c0_41, %c0_42] : memref<4x8x1xf32, #tpu.memory_space<vmem>>, vector<4x8x1xf32>
      %44 = tpu.reciprocal %43 {approx = true} : vector<4x8x1xf32> -> vector<4x8x1xf32>
      %45 = arith.mulf %43, %44 : vector<4x8x1xf32>
      %cst_43 = arith.constant 2.000000e+00 : f32
      %46 = vector.broadcast %cst_43 : f32 to vector<4x8x1xf32>
      %47 = arith.subf %46, %45 : vector<4x8x1xf32>
      %48 = arith.mulf %44, %47 : vector<4x8x1xf32>
      %c0_44 = arith.constant 0 : index
      %c0_45 = arith.constant 0 : index
      %c0_46 = arith.constant 0 : index
      %49 = vector.load %arg12[%c0_44, %c0_45, %c0_46] : memref<4x8x8xf32, #tpu.memory_space<vmem>>, vector<4x8x8xf32>
      %50 = vector.broadcast %48 : vector<4x8x1xf32> to vector<4x8x8xf32>
      %51 = arith.mulf %49, %50 : vector<4x8x8xf32>
      %52 = vector.extract_strided_slice %51 {offsets = [0, 0, 0], sizes = [1, 8, 8], strides = [1, 1, 1]} : vector<4x8x8xf32> to vector<1x8x8xf32>
      %53 = vector.shape_cast %52 : vector<1x8x8xf32> to vector<8x8xf32>
      %54 = vector.extract_strided_slice %51 {offsets = [1, 0, 0], sizes = [1, 8, 8], strides = [1, 1, 1]} : vector<4x8x8xf32> to vector<1x8x8xf32>
      %55 = vector.shape_cast %54 : vector<1x8x8xf32> to vector<8x8xf32>
      %56 = vector.extract_strided_slice %51 {offsets = [2, 0, 0], sizes = [1, 8, 8], strides = [1, 1, 1]} : vector<4x8x8xf32> to vector<1x8x8xf32>
      %57 = vector.shape_cast %56 : vector<1x8x8xf32> to vector<8x8xf32>
      %58 = vector.extract_strided_slice %51 {offsets = [3, 0, 0], sizes = [1, 8, 8], strides = [1, 1, 1]} : vector<4x8x8xf32> to vector<1x8x8xf32>
      %59 = vector.shape_cast %58 : vector<1x8x8xf32> to vector<8x8xf32>
      %60 = tpu.concatenate %53, %55, %57, %59 in 1 : vector<8x8xf32>, vector<8x8xf32>, vector<8x8xf32>, vector<8x8xf32> -> vector<8x32xf32>
      %c0_47 = arith.constant 0 : index
      %c0_48 = arith.constant 0 : index
      %61 = vector.load %arg6[%c0_47, %c0_48] : memref<32x32xf32, #tpu.memory_space<vmem>>, vector<32x32xf32>
      %cst_49 = arith.constant dense<0.000000e+00> : vector<8x32xf32>
      %62 = tpu.matmul %60, %61, %cst_49 {dimension_numbers = #tpu.dot_dimension_numbers<[1], [0], [0], [1], [0, 0, 1, 1], [], []>} : vector<8x32xf32>, vector<32x32xf32>, vector<8x32xf32> -> vector<8x32xf32>
      %c0_50 = arith.constant 0 : index
      %c0_51 = arith.constant 0 : index
      %63 = vector.load %arg7[%c0_50, %c0_51] : memref<1x32xf32, #tpu.memory_space<vmem>>, vector<1x32xf32>
      %64 = vector.broadcast %63 : vector<1x32xf32> to vector<8x32xf32>
      %65 = arith.addf %62, %64 : vector<8x32xf32>
      %c0_52 = arith.constant 0 : index
      %c0_53 = arith.constant 0 : index
      %c0_54 = arith.constant 0 : index
      %66 = vector.load %arg8[%c0_52, %c0_53, %c0_54] : memref<1x8x32xf32, #tpu.memory_space<vmem>>, vector<1x8x32xf32>
      %67 = vector.shape_cast %66 : vector<1x8x32xf32> to vector<8x32xf32>
      %68 = vector.shape_cast %65 : vector<8x32xf32> to vector<1x8x32xf32>
      tpu.vector_store %arg8[%c0_52, %c0_53, %c0_54], %68 {strides = array<i32>} : memref<1x8x32xf32, #tpu.memory_space<vmem>>, vector<1x8x32xf32>,
      %c0_55 = arith.constant 0 : index
      %c0_56 = arith.constant 0 : index
      %c0_57 = arith.constant 0 : index
      %69 = vector.load %arg10[%c0_55, %c0_56, %c0_57] : memref<4x8x1xf32, #tpu.memory_space<vmem>>, vector<4x8x1xf32>
      %c0_58 = arith.constant 0 : index
      %c0_59 = arith.constant 0 : index
      %c0_60 = arith.constant 0 : index
      %c0_61 = arith.constant 0 : index
      %70 = vector.load %arg14[%c0_58, %c0_59, %c0_60, %c0_61] : memref<2x4x8x1xf32, #tpu.memory_space<vmem>>, vector<1x4x8x1xf32>
      %71 = vector.shape_cast %70 : vector<1x4x8x1xf32> to vector<4x8x1xf32>
      %72 = arith.subf %71, %69 : vector<4x8x1xf32>
      %73 = math.exp %72 : vector<4x8x1xf32>
      %74 = arith.mulf %73, %48 : vector<4x8x1xf32>
      %c0_62 = arith.constant 0 : index
      %c0_63 = arith.constant 0 : index
      %c0_64 = arith.constant 0 : index
      %c0_65 = arith.constant 0 : index
      %75 = vector.load %arg13[%c0_62, %c0_63, %c0_64, %c0_65] : memref<2x4x8x8xf32, #tpu.memory_space<vmem>>, vector<1x4x8x8xf32>
      %76 = vector.shape_cast %75 : vector<1x4x8x8xf32> to vector<4x8x8xf32>
      %77 = vector.broadcast %74 : vector<4x8x1xf32> to vector<4x8x8xf32>
      %78 = arith.mulf %76, %77 : vector<4x8x8xf32>
      %cst_66 = arith.constant dense<0.000000e+00> : vector<8x8xf32>
      %79 = vector.multi_reduction <add>, %78, %cst_66 [0] : vector<4x8x8xf32> to vector<8x8xf32>
      %cst_67 = arith.constant 2.500000e-01 : f32
      %80 = vector.broadcast %cst_67 : f32 to vector<8x8xf32>
      %81 = arith.mulf %79, %80 : vector<8x8xf32>
      %c0_68 = arith.constant 0 : index
      %c0_69 = arith.constant 0 : index
      %c0_70 = arith.constant 0 : index
      %82 = vector.load %arg9[%c0_68, %c0_69, %c0_70] : memref<1x8x16xf32, #tpu.memory_space<vmem>>, vector<1x8x8xf32>
      %83 = vector.shape_cast %82 : vector<1x8x8xf32> to vector<8x8xf32>
      %84 = vector.shape_cast %81 : vector<8x8xf32> to vector<1x8x8xf32>
      tpu.vector_store %arg9[%c0_68, %c0_69, %c0_70], %84 {strides = array<i32>} : memref<1x8x16xf32, #tpu.memory_space<vmem>>, vector<1x8x8xf32>,
      %c1 = arith.constant 1 : index
      %c0_71 = arith.constant 0 : index
      %c0_72 = arith.constant 0 : index
      %c0_73 = arith.constant 0 : index
      %85 = vector.load %arg14[%c1, %c0_71, %c0_72, %c0_73] : memref<2x4x8x1xf32, #tpu.memory_space<vmem>>, vector<1x4x8x1xf32>
      %86 = vector.shape_cast %85 : vector<1x4x8x1xf32> to vector<4x8x1xf32>
      %87 = arith.subf %86, %69 : vector<4x8x1xf32>
      %88 = math.exp %87 : vector<4x8x1xf32>
      %89 = arith.mulf %88, %48 : vector<4x8x1xf32>
      %c1_74 = arith.constant 1 : index
      %c0_75 = arith.constant 0 : index
      %c0_76 = arith.constant 0 : index
      %c0_77 = arith.constant 0 : index
      %90 = vector.load %arg13[%c1_74, %c0_75, %c0_76, %c0_77] : memref<2x4x8x8xf32, #tpu.memory_space<vmem>>, vector<1x4x8x8xf32>
      %91 = vector.shape_cast %90 : vector<1x4x8x8xf32> to vector<4x8x8xf32>
      %92 = vector.broadcast %89 : vector<4x8x1xf32> to vector<4x8x8xf32>
      %93 = arith.mulf %91, %92 : vector<4x8x8xf32>
      %cst_78 = arith.constant dense<0.000000e+00> : vector<8x8xf32>
      %94 = vector.multi_reduction <add>, %93, %cst_78 [0] : vector<4x8x8xf32> to vector<8x8xf32>
      %cst_79 = arith.constant 2.500000e-01 : f32
      %95 = vector.broadcast %cst_79 : f32 to vector<8x8xf32>
      %96 = arith.mulf %94, %95 : vector<8x8xf32>
      %c0_80 = arith.constant 0 : index
      %c0_81 = arith.constant 0 : index
      %c8 = arith.constant 8 : index
      %97 = vector.load %arg9[%c0_80, %c0_81, %c8] : memref<1x8x16xf32, #tpu.memory_space<vmem>>, vector<1x8x8xf32>
      %98 = vector.shape_cast %97 : vector<1x8x8xf32> to vector<8x8xf32>
      %99 = vector.shape_cast %96 : vector<8x8xf32> to vector<1x8x8xf32>
      tpu.vector_store %arg9[%c0_80, %c0_81, %c8], %99 {strides = array<i32>} : memref<1x8x16xf32, #tpu.memory_space<vmem>>, vector<1x8x8xf32>,
    } else {
    }
    return
  }
  func.func @transform_0(%arg0: i32, %arg1: i32, %arg2: i32) -> (i32, i32, i32, i32) {
    %c0_i32 = arith.constant 0 : i32
    %c0_i32_0 = arith.constant 0 : i32
    %c0_i32_1 = arith.constant 0 : i32
    return %arg0, %c0_i32, %arg1, %c0_i32_0 : i32, i32, i32, i32
  }
  func.func @transform_1(%arg0: i32, %arg1: i32, %arg2: i32) -> (i32, i32, i32, i32) {
    %c0_i32 = arith.constant 0 : i32
    %c0_i32_0 = arith.constant 0 : i32
    %c0_i32_1 = arith.constant 0 : i32
    return %arg0, %c0_i32, %arg2, %c0_i32_0 : i32, i32, i32, i32
  }
  func.func @transform_2(%arg0: i32, %arg1: i32, %arg2: i32) -> (i32, i32, i32, i32) {
    %c0_i32 = arith.constant 0 : i32
    %c0_i32_0 = arith.constant 0 : i32
    %c0_i32_1 = arith.constant 0 : i32
    return %arg0, %c0_i32, %arg2, %c0_i32_0 : i32, i32, i32, i32
  }
  func.func @transform_3(%arg0: i32, %arg1: i32, %arg2: i32) -> (i32, i32) {
    %c0_i32 = arith.constant 0 : i32
    %c0_i32_0 = arith.constant 0 : i32
    %c0_i32_1 = arith.constant 0 : i32
    return %c0_i32, %c0_i32_0 : i32, i32
  }
  func.func @transform_4(%arg0: i32, %arg1: i32, %arg2: i32) -> (i32, i32) {
    %c0_i32 = arith.constant 0 : i32
    %c0_i32_0 = arith.constant 0 : i32
    %c0_i32_1 = arith.constant 0 : i32
    return %c0_i32, %c0_i32_0 : i32, i32
  }
  func.func @transform_5(%arg0: i32, %arg1: i32, %arg2: i32) -> (i32, i32, i32) {
    %c0_i32 = arith.constant 0 : i32
    %c0_i32_0 = arith.constant 0 : i32
    return %arg0, %arg1, %c0_i32 : i32, i32, i32
  }
  func.func @transform_6(%arg0: i32, %arg1: i32, %arg2: i32) -> (i32, i32, i32) {
    %c0_i32 = arith.constant 0 : i32
    %c0_i32_0 = arith.constant 0 : i32
    return %arg0, %arg1, %c0_i32 : i32, i32, i32
  }
}

</mosaic_0001>

<llo_original>
// kernel: tpu_custom_call.1
$region0: #{tpu_custom_call.1}
  #allocation0 [shape = 'u32[]', space=smem, size = 0x4, offset = 0x4, fixed_abs, tag = 'smem constant byte address 0x4 - core index']
  #allocation1 [shape = 'u32[144,128]{1,0:T(1,128)}', space=vmem, size = 0x12000, scoped, tag = 'internal scratch']
  #allocation2 [shape = 'f32[4,8,1]{2,1,0:T(8,128)}', space=vmem, size = 0x4000, scoped, tag = 'scratch operand']
  #allocation3 [shape = 'f32[4,8,1]{2,1,0:T(8,128)}', space=vmem, size = 0x4000, scoped, tag = 'scratch operand']
  #allocation4 [shape = 'f32[4,8,8]{2,1,0:T(8,128)}', space=vmem, size = 0x4000, scoped, tag = 'scratch operand']
  #allocation5 [shape = 'f32[2,4,8,8]{3,2,1,0:T(8,128)}', space=vmem, size = 0x8000, scoped, tag = 'scratch operand']
  #allocation6 [shape = 'f32[2,4,8,1]{3,2,1,0:T(8,128)}', space=vmem, size = 0x8000, scoped, tag = 'scratch operand']
  %s0 = inlined_call_operand.hbm [shape: f32[2,4,16,8], index: 0, kind: input, shape index: {}]
  %s1 = inlined_call_operand.hbm [shape: f32[2,4,16,8], index: 1, kind: input, shape index: {}]
  %s2 = inlined_call_operand.hbm [shape: f32[2,4,16,8], index: 2, kind: input, shape index: {}]
  %s3 = inlined_call_operand.hbm [shape: f32[32,32], index: 3, kind: input, shape index: {}]
  %s4 = inlined_call_operand.hbm [shape: f32[1,32], index: 4, kind: input, shape index: {}]
  %s5 = inlined_call_operand.hbm [shape: f32[2,16,32], index: 5, kind: output, shape index: {0}]
  %s6 = inlined_call_operand.hbm [shape: f32[2,16,16], index: 6, kind: output, shape index: {1}]
  %7 = xla_tuple %s5, %s6
  %s8 = sld [smem:[#allocation0]]
  $region89: #{tpu_custom_call.1} parent=0
    _
  %s10 = ssub.s32 1, %s8
  %s11 = scalar_select 0, %s10, %s8
  $region1: #{tpu_custom_call.1} parent=0
    #allocation7 [shape = 'u8[32768]{0}', space=vmem, size = 0x8000, scoped, tag = 'input window, operand 0']
    #allocation8 [shape = 's32[2]{0}', space=sflag, size = 0x8, scoped, tag = 'scoped memory for tpu_custom_call.1']
    #allocation9 [shape = 's32[2]{0}', space=sflag, size = 0x8, scoped, tag = 'scoped memory for tpu_custom_call.1']
    #allocation10 [shape = 'u8[32768]{0}', space=vmem, size = 0x8000, scoped, tag = 'input window, operand 1']
    #allocation11 [shape = 's32[2]{0}', space=sflag, size = 0x8, scoped, tag = 'scoped memory for tpu_custom_call.1']
    #allocation12 [shape = 'u8[32768]{0}', space=vmem, size = 0x8000, scoped, tag = 'input window, operand 2']
    #allocation13 [shape = 'u8[16384]{0}', space=vmem, size = 0x4000, scoped, tag = 'input window, operand 3, single buffered']
    #allocation14 [shape = 's32[1]{0}', space=sflag, size = 0x4, scoped, tag = 'scoped memory for tpu_custom_call.1']
    #allocation15 [shape = 'u8[512]{0}', space=vmem, size = 0x400, scoped, tag = 'input window, operand 4, single buffered']
    #allocation16 [shape = 'u8[8192]{0}', space=vmem, size = 0x2000, scoped, tag = 'output window, operand 0']
    #allocation17 [shape = 'u8[8192]{0}', space=vmem, size = 0x2000, scoped, tag = 'output window, operand 1']
    #allocation18 [shape = 's32[2]{0}', space=sflag, size = 0x8, scoped, tag = 'scoped memory for tpu_custom_call.1']
    %12 = vsyncpa [#allocation8], 0
    %s13 = scalar_lea.sflag [#allocation8], 1
    %14 = vsyncpa %s13, 0
    %15 = vsyncpa [#allocation11], 0
    %s16 = scalar_lea.sflag [#allocation11], 1
    %17 = vsyncpa %s16, 0
    %18 = vsyncpa [#allocation14], 0
    %19 = vsyncpa [#allocation9], 0
    %s20 = scalar_lea.sflag [#allocation9], 1
    %21 = vsyncpa %s20, 0
    %22 = vsyncpa [#allocation18], 0
    %s23 = scalar_lea.sflag [#allocation18], 1
    %24 = vsyncpa %s23, 0
    loop: start=0, step=1, limit=10
    $region2: #{tpu_custom_call.1} parent=1 // loop_pre_header
      _
    $region3: #{tpu_custom_call.1} parent=1 // loop_header
      %s26 = sphi 0, %s30
      %p27 = scmp.ge.s32.totalorder %s26, 10
      %s33 = sphi 0, %s52
      %s34 = sphi 0, %s48
      %s35 = sphi 0, %s44
      %s36 = sphi 0, %s33
      %s37 = sphi 0, %s34
      %s38 = sphi 0, %s35
      %s39 = sphi 0, %s36
      %s40 = sphi 0, %s37
      %s41 = sphi 0, %s38
      %s57 = sphi 0, %s59
      %s60 = sphi 0, %s57
      %s61 = sphi 0, %s60
      %s77 = sphi 0, %s61
      %s85 = sphi 0, %s87
      %s88 = sphi 0, %s85
      %s89 = sphi 0, %s88
      %s105 = sphi 0, %s89
      %s113 = sphi 0, %s115
      %s116 = sphi 0, %s113
      %s117 = sphi 0, %s116
      %s133 = sphi 0, %s117
      %s137 = sphi 0, %s137
      %s139 = sphi 0, %s137
      %s140 = sphi 0, %s139
      %s154 = sphi 0, %s140
      %s158 = sphi 0, %s158
      %s160 = sphi 0, %s158
      %s161 = sphi 0, %s160
      %s175 = sphi 0, %s161
      %s183 = sphi 0, %s185
      %s186 = sphi 0, %s183
      %s187 = sphi 0, %s186
      %s203 = sphi 0, %s187
      %s211 = sphi 0, %s213
      %s214 = sphi 0, %s211
      %s215 = sphi 0, %s214
      %s231 = sphi 0, %s215
    $region4: #{tpu_custom_call.1} parent=1 // loop_header_branch
      %29 = sbr.rel (%p27) target = $region8
    $region5: #{tpu_custom_call.1} parent=1 // loop_body
      %s31 = ssub.s32 %s26, 1
      %s32 = ssub.s32 %s26, 2
      %s42 = sadd.s32 1, %s35
      %p43 = scmp.ge.s32.totalorder %s42, 2
      %s44 = scalar_select %p43, 0, %s42
      %s45 = sadd.s32 1, %s34
      %s46 = scalar_select %p43, %s45, %s34
      %p47 = scmp.ge.s32.totalorder %s46, 2
      %s48 = scalar_select %p47, 0, %s46
      %s49 = sadd.s32 1, %s33
      %s50 = scalar_select %p47, %s49, %s33
      %p51 = scmp.ge.s32.totalorder %s50, 2
      %s52 = scalar_select %p51, 0, %s50
      %s53 = ssub.s32 %s33, %s52
      %s54 = ssub.s32 %s34, %s48
      %s55 = sor.u32 %s53, %s54
      %p56 = scmp.eq.s32.totalorder %s55, 0
      %s58 = sadd.s32 %s57, 1
      %s59 = scalar_select %p56, %s57, %s58
      %p62 = pneg %p56
      %p63 = scmp.eq.s32.totalorder %s26, 7
      %p64 = por %p62, %p63
      %p65 = scmp.ne.s32.totalorder %s57, %s60
      %p66 = scmp.eq.s32.totalorder %s26, 0
      %p67 = por %p65, %p66
      %p68 = scmp.ne.s32.totalorder %s57, %s60
      %p69 = scmp.eq.s32.totalorder %s31, 7
      %p70 = por %p68, %p69
      %p71 = scmp.ne.s32.totalorder %s60, %s61
      %p72 = scmp.eq.s32.totalorder %s31, 0
      %p73 = por %p71, %p72
      %p74 = scmp.ne.s32.totalorder %s60, %s61
      %p75 = scmp.eq.s32.totalorder %s32, 7
      %p76 = por %p74, %p75
      %p78 = scmp.ne.s32.totalorder %s61, %s77
      %p79 = scmp.eq.s32.totalorder %s32, 0
      %p80 = por %p78, %p79
      %s81 = ssub.s32 %s33, %s52
      %s82 = ssub.s32 %s35, %s44
      %s83 = sor.u32 %s81, %s82
      %p84 = scmp.eq.s32.totalorder %s83, 0
      %s86 = sadd.s32 %s85, 1
      %s87 = scalar_select %p84, %s85, %s86
      %p90 = pneg %p84
      %p91 = scmp.eq.s32.totalorder %s26, 7
      %p92 = por %p90, %p91
      %p93 = scmp.ne.s32.totalorder %s85, %s88
      %p94 = scmp.eq.s32.totalorder %s26, 0
      %p95 = por %p93, %p94
      %p96 = scmp.ne.s32.totalorder %s85, %s88
      %p97 = scmp.eq.s32.totalorder %s31, 7
      %p98 = por %p96, %p97
      %p99 = scmp.ne.s32.totalorder %s88, %s89
      %p100 = scmp.eq.s32.totalorder %s31, 0
      %p101 = por %p99, %p100
      %p102 = scmp.ne.s32.totalorder %s88, %s89
      %p103 = scmp.eq.s32.totalorder %s32, 7
      %p104 = por %p102, %p103
      %p106 = scmp.ne.s32.totalorder %s89, %s105
      %p107 = scmp.eq.s32.totalorder %s32, 0
      %p108 = por %p106, %p107
      %s109 = ssub.s32 %s33, %s52
      %s110 = ssub.s32 %s35, %s44
      %s111 = sor.u32 %s109, %s110
      %p112 = scmp.eq.s32.totalorder %s111, 0
      %s114 = sadd.s32 %s113, 1
      %s115 = scalar_select %p112, %s113, %s114
      %p118 = pneg %p112
      %p119 = scmp.eq.s32.totalorder %s26, 7
      %p120 = por %p118, %p119
      %p121 = scmp.ne.s32.totalorder %s113, %s116
      %p122 = scmp.eq.s32.totalorder %s26, 0
      %p123 = por %p121, %p122
      %p124 = scmp.ne.s32.totalorder %s113, %s116
      %p125 = scmp.eq.s32.totalorder %s31, 7
      %p126 = por %p124, %p125
      %p127 = scmp.ne.s32.totalorder %s116, %s117
      %p128 = scmp.eq.s32.totalorder %s31, 0
      %p129 = por %p127, %p128
      %p130 = scmp.ne.s32.totalorder %s116, %s117
      %p131 = scmp.eq.s32.totalorder %s32, 7
      %p132 = por %p130, %p131
      %p134 = scmp.ne.s32.totalorder %s117, %s133
      %p135 = scmp.eq.s32.totalorder %s32, 0
      %p136 = por %p134, %p135
      %s138 = sadd.s32 %s137, 1
      %p141 = scmp.eq.s32.totalorder %s26, 7
      %p142 = scmp.ne.s32.totalorder %s137, %s139
      %p143 = scmp.eq.s32.totalorder %s26, 0
      %p144 = por %p142, %p143
      %p145 = scmp.ne.s32.totalorder %s137, %s139
      %p146 = scmp.eq.s32.totalorder %s31, 7
      %p147 = por %p145, %p146
      %p148 = scmp.ne.s32.totalorder %s139, %s140
      %p149 = scmp.eq.s32.totalorder %s31, 0
      %p150 = por %p148, %p149
      %p151 = scmp.ne.s32.totalorder %s139, %s140
      %p152 = scmp.eq.s32.totalorder %s32, 7
      %p153 = por %p151, %p152
      %p155 = scmp.ne.s32.totalorder %s140, %s154
      %p156 = scmp.eq.s32.totalorder %s32, 0
      %p157 = por %p155, %p156
      %s159 = sadd.s32 %s158, 1
      %p162 = scmp.eq.s32.totalorder %s26, 7
      %p163 = scmp.ne.s32.totalorder %s158, %s160
      %p164 = scmp.eq.s32.totalorder %s26, 0
      %p165 = por %p163, %p164
      %p166 = scmp.ne.s32.totalorder %s158, %s160
      %p167 = scmp.eq.s32.totalorder %s31, 7
      %p168 = por %p166, %p167
      %p169 = scmp.ne.s32.totalorder %s160, %s161
      %p170 = scmp.eq.s32.totalorder %s31, 0
      %p171 = por %p169, %p170
      %p172 = scmp.ne.s32.totalorder %s160, %s161
      %p173 = scmp.eq.s32.totalorder %s32, 7
      %p174 = por %p172, %p173
      %p176 = scmp.ne.s32.totalorder %s161, %s175
      %p177 = scmp.eq.s32.totalorder %s32, 0
      %p178 = por %p176, %p177
      %s179 = ssub.s32 %s33, %s52
      %s180 = ssub.s32 %s34, %s48
      %s181 = sor.u32 %s179, %s180
      %p182 = scmp.eq.s32.totalorder %s181, 0
      %s184 = sadd.s32 %s183, 1
      %s185 = scalar_select %p182, %s183, %s184
      %p188 = pneg %p182
      %p189 = scmp.eq.s32.totalorder %s26, 7
      %p190 = por %p188, %p189
      %p191 = scmp.ne.s32.totalorder %s183, %s186
      %p192 = scmp.eq.s32.totalorder %s26, 0
      %p193 = por %p191, %p192
      %p194 = scmp.ne.s32.totalorder %s183, %s186
      %p195 = scmp.eq.s32.totalorder %s31, 7
      %p196 = por %p194, %p195
      %p197 = scmp.ne.s32.totalorder %s186, %s187
      %p198 = scmp.eq.s32.totalorder %s31, 0
      %p199 = por %p197, %p198
      %p200 = scmp.ne.s32.totalorder %s186, %s187
      %p201 = scmp.eq.s32.totalorder %s32, 7
      %p202 = por %p200, %p201
      %p204 = scmp.ne.s32.totalorder %s187, %s203
      %p205 = scmp.eq.s32.totalorder %s32, 0
      %p206 = por %p204, %p205
      %s207 = ssub.s32 %s33, %s52
      %s208 = ssub.s32 %s34, %s48
      %s209 = sor.u32 %s207, %s208
      %p210 = scmp.eq.s32.totalorder %s209, 0
      %s212 = sadd.s32 %s211, 1
      %s213 = scalar_select %p210, %s211, %s212
      %p216 = pneg %p210
      %p217 = scmp.eq.s32.totalorder %s26, 7
      %p218 = por %p216, %p217
      %p219 = scmp.ne.s32.totalorder %s211, %s214
      %p220 = scmp.eq.s32.totalorder %s26, 0
      %p221 = por %p219, %p220
      %p222 = scmp.ne.s32.totalorder %s211, %s214
      %p223 = scmp.eq.s32.totalorder %s31, 7
      %p224 = por %p222, %p223
      %p225 = scmp.ne.s32.totalorder %s214, %s215
      %p226 = scmp.eq.s32.totalorder %s31, 0
      %p227 = por %p225, %p226
      %p228 = scmp.ne.s32.totalorder %s214, %s215
      %p229 = scmp.eq.s32.totalorder %s32, 7
      %p230 = por %p228, %p229
      %p232 = scmp.ne.s32.totalorder %s215, %s231
      %p233 = scmp.eq.s32.totalorder %s32, 0
      %p234 = por %p232, %p233
      %p235 = scmp.le.s32.totalorder 1, %s26
      %p236 = scmp.lt.s32.totalorder %s26, 9
      %p237 = pnand %p235, %p236
      %p238 = pneg %p237
      // Predicated region
      $region9: #{tpu_custom_call.1} parent=5 // pred_check
        _
      $region10: #{tpu_custom_call.1} parent=5 // pred_check_branch
        %240 = sbr.rel (%p237) target = $region12
      $region11: #{tpu_custom_call.1} parent=5 // pred_region
        %s241 = ssub.s32 %s26, 1
        // Predicated region
        $region13: #{tpu_custom_call.1} parent=11 // pred_check
          %p242 = pneg %p150
        $region14: #{tpu_custom_call.1} parent=11 // pred_check_branch
          %244 = sbr.rel (%p242) target = $region16
        $region15: #{tpu_custom_call.1} parent=11 // pred_region
          %s246 = ssub.s32 512, 512
          %247 = vsyncadd [#allocation14], %s246
          %s248 = sshll.u32 [#allocation13], 4
          %s249 = int_to_ptr.vmem [resolvable:$true] %s248
          %254 = dma.hbm_to_vmem [thread:$0]  %s3, 512, %s249, [#allocation14], 128, 128, 8
        $region16: #{tpu_custom_call.1} parent=11 // pred_fallthru
          _
        // Predicated region
        $region17: #{tpu_custom_call.1} parent=11 // pred_check
          %p255 = pneg %p171
        $region18: #{tpu_custom_call.1} parent=11 // pred_check_branch
          %257 = sbr.rel (%p255) target = $region20
        $region19: #{tpu_custom_call.1} parent=11 // pred_region
          %s259 = ssub.s32 16, 16
          %260 = vsyncadd [#allocation14], %s259
          %s262 = sshll.u32 [#allocation15], 4
          %s263 = int_to_ptr.vmem [resolvable:$true] %s262
          %265 = dma.hbm_to_vmem [thread:$0]  %s4, 16, %s263, [#allocation14]
        $region20: #{tpu_custom_call.1} parent=11 // pred_fallthru
          _
      $region12: #{tpu_custom_call.1} parent=5 // pred_fallthru
        _
      %p266 = scmp.lt.s32.totalorder %s26, 8
      // Predicated region
      $region21: #{tpu_custom_call.1} parent=5 // pred_check
        %p267 = pneg %p266
      $region22: #{tpu_custom_call.1} parent=5 // pred_check_branch
        %269 = sbr.rel (%p267) target = $region24
      $region23: #{tpu_custom_call.1} parent=5 // pred_region
        // Predicated region
        $region25: #{tpu_custom_call.1} parent=23 // pred_check
          %p270 = pneg %p67
        $region26: #{tpu_custom_call.1} parent=23 // pred_check_branch
          %272 = sbr.rel (%p270) target = $region28
        $region27: #{tpu_custom_call.1} parent=23 // pred_region
          %s273 = sand.u32 %s57, 1
          %s274 = scalar_lea.sflag [#allocation8], %s273
          %s275 = sand.u32 %s57, 1
          %s276 = smul.addr %s275, 32
          %s277 = scalar_lea.vmem [#allocation7], %s276
          %s279 = ssub.s32 512, 512
          %280 = vsyncadd %s274, %s279
          %s281 = smul.addr %s33, 8
          %s282 = sadd.s32 %s34, %s281
          %s283 = smul.addr %s282, 128
          %s284 = scalar_lea.hbm %s0, %s283
          %s285 = sshll.u32 %s277, 4
          %s286 = int_to_ptr.vmem [resolvable:$true] %s285
          %291 = dma.hbm_to_vmem [thread:$0]  %s284, 512, %s286, %s274, 256, 128, 8
        $region28: #{tpu_custom_call.1} parent=23 // pred_fallthru
          _
        // Predicated region
        $region29: #{tpu_custom_call.1} parent=23 // pred_check
          %p292 = pneg %p95
        $region30: #{tpu_custom_call.1} parent=23 // pred_check_branch
          %294 = sbr.rel (%p292) target = $region32
        $region31: #{tpu_custom_call.1} parent=23 // pred_region
          %s295 = sand.u32 %s26, 1
          %s296 = scalar_lea.sflag [#allocation11], %s295
          %s297 = sand.u32 %s85, 1
          %s298 = smul.addr %s297, 32
          %s299 = scalar_lea.vmem [#allocation10], %s298
          %s301 = ssub.s32 512, 512
          %302 = vsyncadd %s296, %s301
          %s303 = smul.addr %s33, 8
          %s304 = sadd.s32 %s35, %s303
          %s305 = smul.addr %s304, 128
          %s306 = scalar_lea.hbm %s1, %s305
          %s307 = sshll.u32 %s299, 4
          %s308 = int_to_ptr.vmem [resolvable:$true] %s307
          %313 = dma.hbm_to_vmem [thread:$0]  %s306, 512, %s308, %s296, 256, 128, 8
        $region32: #{tpu_custom_call.1} parent=23 // pred_fallthru
          _
        // Predicated region
        $region33: #{tpu_custom_call.1} parent=23 // pred_check
          %p314 = pneg %p123
        $region34: #{tpu_custom_call.1} parent=23 // pred_check_branch
          %316 = sbr.rel (%p314) target = $region36
        $region35: #{tpu_custom_call.1} parent=23 // pred_region
          %s317 = sand.u32 %s26, 1
          %s318 = scalar_lea.sflag [#allocation11], %s317
          %s319 = sand.u32 %s113, 1
          %s320 = smul.addr %s319, 32
          %s321 = scalar_lea.vmem [#allocation12], %s320
          %s323 = ssub.s32 512, 512
          %324 = vsyncadd %s318, %s323
          %s325 = smul.addr %s33, 8
          %s326 = sadd.s32 %s35, %s325
          %s327 = smul.addr %s326, 128
          %s328 = scalar_lea.hbm %s2, %s327
          %s329 = sshll.u32 %s321, 4
          %s330 = int_to_ptr.vmem [resolvable:$true] %s329
          %335 = dma.hbm_to_vmem [thread:$0]  %s328, 512, %s330, %s318, 256, 128, 8
        $region36: #{tpu_custom_call.1} parent=23 // pred_fallthru
          _
      $region24: #{tpu_custom_call.1} parent=5 // pred_fallthru
        _
      %p336 = scmp.le.s32.totalorder 1, %s26
      %p337 = scmp.lt.s32.totalorder %s26, 9
      %p338 = pnand %p336, %p337
      %p339 = pneg %p338
      // Predicated region
      $region37: #{tpu_custom_call.1} parent=5 // pred_check
        _
      $region38: #{tpu_custom_call.1} parent=5 // pred_check_branch
        %341 = sbr.rel (%p338) target = $region40
      $region39: #{tpu_custom_call.1} parent=5 // pred_region
        %s342 = ssub.s32 %s26, 1
        %s343 = sand.u32 %s60, 1
        %s344 = scalar_lea.sflag [#allocation8], %s343
        %s345 = sand.u32 %s60, 1
        %s346 = smul.addr %s345, 32
        %s347 = scalar_lea.vmem [#allocation7], %s346
        // Predicated region
        $region41: #{tpu_custom_call.1} parent=39 // pred_check
          %p348 = pneg %p73
        $region42: #{tpu_custom_call.1} parent=39 // pred_check_branch
          %350 = sbr.rel (%p348) target = $region44
        $region43: #{tpu_custom_call.1} parent=39 // pred_region
          %351 = dma.done %s344, 512
        $region44: #{tpu_custom_call.1} parent=39 // pred_fallthru
          _
        %s352 = sand.u32 %s31, 1
        %s353 = scalar_lea.sflag [#allocation11], %s352
        %s354 = sand.u32 %s88, 1
        %s355 = smul.addr %s354, 32
        %s356 = scalar_lea.vmem [#allocation10], %s355
        // Predicated region
        $region45: #{tpu_custom_call.1} parent=39 // pred_check
          %p357 = pneg %p101
        $region46: #{tpu_custom_call.1} parent=39 // pred_check_branch
          %359 = sbr.rel (%p357) target = $region48
        $region47: #{tpu_custom_call.1} parent=39 // pred_region
          %360 = dma.done %s353, 512
        $region48: #{tpu_custom_call.1} parent=39 // pred_fallthru
          _
        %s361 = sand.u32 %s31, 1
        %s362 = scalar_lea.sflag [#allocation11], %s361
        %s363 = sand.u32 %s116, 1
        %s364 = smul.addr %s363, 32
        %s365 = scalar_lea.vmem [#allocation12], %s364
        // Predicated region
        $region49: #{tpu_custom_call.1} parent=39 // pred_check
          %p366 = pneg %p129
        $region50: #{tpu_custom_call.1} parent=39 // pred_check_branch
          %368 = sbr.rel (%p366) target = $region52
        $region51: #{tpu_custom_call.1} parent=39 // pred_region
          %369 = dma.done %s362, 512
        $region52: #{tpu_custom_call.1} parent=39 // pred_fallthru
          _
        // Predicated region
        $region53: #{tpu_custom_call.1} parent=39 // pred_check
          %p370 = pneg %p150
        $region54: #{tpu_custom_call.1} parent=39 // pred_check_branch
          %372 = sbr.rel (%p370) target = $region56
        $region55: #{tpu_custom_call.1} parent=39 // pred_region
          %373 = dma.done [#allocation14], 512
        $region56: #{tpu_custom_call.1} parent=39 // pred_fallthru
          _
        // Predicated region
        $region57: #{tpu_custom_call.1} parent=39 // pred_check
          %p374 = pneg %p171
        $region58: #{tpu_custom_call.1} parent=39 // pred_check_branch
          %376 = sbr.rel (%p374) target = $region60
        $region59: #{tpu_custom_call.1} parent=39 // pred_region
          %377 = dma.done [#allocation14], 16
        $region60: #{tpu_custom_call.1} parent=39 // pred_fallthru
          _
        %s378 = sand.u32 %s60, 1
        %s379 = scalar_lea.sflag [#allocation8], %s378
        %s380 = sand.u32 %s60, 1
        %s381 = smul.addr %s380, 32
        %s382 = scalar_lea.vmem [#allocation7], %s381
        %p383 = pneg %p73
        %p384 = pneg %p70
        %s385 = sand.u32 %s31, 1
        %s386 = scalar_lea.sflag [#allocation11], %s385
        %s387 = sand.u32 %s88, 1
        %s388 = smul.addr %s387, 32
        %s389 = scalar_lea.vmem [#allocation10], %s388
        %p390 = pneg %p101
        %p391 = pneg %p98
        %s392 = sand.u32 %s31, 1
        %s393 = scalar_lea.sflag [#allocation11], %s392
        %s394 = sand.u32 %s116, 1
        %s395 = smul.addr %s394, 32
        %s396 = scalar_lea.vmem [#allocation12], %s395
        %p397 = pneg %p129
        %p398 = pneg %p126
        %p399 = pneg %p150
        %p400 = pneg %p147
        %p401 = pneg %p171
        %p402 = pneg %p168
        %p403 = pneg %p199
        %p404 = pneg %p196
        %s405 = sand.u32 %s186, 1
        %s406 = scalar_lea.sflag [#allocation9], %s405
        %s407 = sand.u32 %s186, 1
        %s408 = smul.addr %s407, 8
        %s409 = scalar_lea.vmem [#allocation16], %s408
        %p410 = pneg %p227
        %p411 = pneg %p224
        %s412 = sand.u32 %s214, 1
        %s413 = scalar_lea.sflag [#allocation18], %s412
        %s414 = sand.u32 %s214, 1
        %s415 = smul.addr %s414, 8
        %s416 = scalar_lea.vmem [#allocation17], %s415
        %p417 = scmp.eq.s32.totalorder %s38, 0
        // Predicated region
        $region61: #{tpu_custom_call.1} parent=39 // pred_check
          %p418 = pneg %p417
        $region62: #{tpu_custom_call.1} parent=39 // pred_check_branch
          %420 = sbr.rel (%p418) target = $region64
        $region63: #{tpu_custom_call.1} parent=39 // pred_region
          %vm421 = vcmask 7168
          %422 = vst.msk [vmem:[#allocation2] sm:$0xff] %vm421, -inf
          %423 = vst.msk [vmem:[#allocation2 + $0x8] sm:$0xff] %vm421, -inf
          %424 = vst.msk [vmem:[#allocation2 + $0x10] sm:$0xff] %vm421, -inf
          %425 = vst.msk [vmem:[#allocation2 + $0x18] sm:$0xff] %vm421, -inf
          %426 = vst.msk [vmem:[#allocation3] sm:$0xff] %vm421, 0.0
          %427 = vst.msk [vmem:[#allocation3 + $0x8] sm:$0xff] %vm421, 0.0
          %428 = vst.msk [vmem:[#allocation3 + $0x10] sm:$0xff] %vm421, 0.0
          %429 = vst.msk [vmem:[#allocation3 + $0x18] sm:$0xff] %vm421, 0.0
          %vm430 = vcmask 64512
          %431 = vst.msk [vmem:[#allocation4] sm:$0xff] %vm430, 0.0
          %432 = vst.msk [vmem:[#allocation4 + $0x8] sm:$0xff] %vm430, 0.0
          %433 = vst.msk [vmem:[#allocation4 + $0x10] sm:$0xff] %vm430, 0.0
          %434 = vst.msk [vmem:[#allocation4 + $0x18] sm:$0xff] %vm430, 0.0
        $region64: #{tpu_custom_call.1} parent=39 // pred_fallthru
          _
        %v435 = vld [vmem:[%s347] sm:$0xff]
        %v436 = vld [vmem:[%s347 + $0x8] sm:$0xff]
        %v437 = vld [vmem:[%s347 + $0x10] sm:$0xff]
        %v438 = vld [vmem:[%s347 + $0x18] sm:$0xff]
        %v439 = vld [vmem:[%s356] sm:$0xff]
        %v440 = vld [vmem:[%s356 + $0x8] sm:$0xff]
        %v441 = vld [vmem:[%s356 + $0x10] sm:$0xff]
        %v442 = vld [vmem:[%s356 + $0x18] sm:$0xff]
        %vm443 = vcmask 64512
        %v445 = vsel %vm443, %v435, 0
        %v448 = vsel %vm443, %v439, 0
        %450 = vmatprep.subr.mxu0 0.0
        %451 = vmatpush1.xpose.msra.mxu0 %v448
        %452 = vmatprep.subr.mxu0 0.0
        %453 = vmatpush1.xpose.msra.mxu0 0.0
        %454 = vmatprep.subr.mxu0 0.0
        %455 = vmatpush1.xpose.msra.mxu0 0.0
        %456 = vmatprep.subr.mxu0 0.0
        %457 = vmatpush1.xpose.msra.mxu0 0.0
        %458 = vmatprep.subr.mxu0 0.0
        %459 = vmatpush1.xpose.msra.mxu0 0.0
        %460 = vmatprep.subr.mxu0 0.0
        %461 = vmatpush1.xpose.msra.mxu0 0.0
        %462 = vmatprep.subr.mxu0 0.0
        %463 = vmatpush1.xpose.msra.mxu0 0.0
        %464 = vmatprep.subr.mxu0 0.0
        %465 = vmatpush1.xpose.msra.mxu0 0.0
        %466 = vmatprep.subr.mxu0 0.0
        %467 = vmatpush1.xpose.msra.mxu0 0.0
        %468 = vmatprep.subr.mxu0 0.0
        %469 = vmatpush1.xpose.msra.mxu0 0.0
        %470 = vmatprep.subr.mxu0 0.0
        %471 = vmatpush1.xpose.msra.mxu0 0.0
        %472 = vmatprep.subr.mxu0 0.0
        %473 = vmatpush1.xpose.msra.mxu0 0.0
        %474 = vmatprep.subr.mxu0 0.0
        %475 = vmatpush1.xpose.msra.mxu0 0.0
        %476 = vmatprep.subr.mxu0 0.0
        %477 = vmatpush1.xpose.msra.mxu0 0.0
        %478 = vmatprep.subr.mxu0 0.0
        %479 = vmatpush1.xpose.msra.mxu0 0.0
        %480 = vmatprep.subr.mxu0 0.0
        %481 = vmatpush1.xpose.msra.mxu0 0.0
        %482 = vmatprep.subr.mxu0 0.0
        %483 = vmatpush1.xpose.msra.mxu0 0.0
        %484 = vmatprep.subr.mxu0 0.0
        %485 = vmatpush1.xpose.msra.mxu0 0.0
        %486 = vmatprep.subr.mxu0 0.0
        %487 = vmatpush1.xpose.msra.mxu0 0.0
        %488 = vmatprep.subr.mxu0 0.0
        %489 = vmatpush1.xpose.msra.mxu0 0.0
        %490 = vmatprep.subr.mxu0 0.0
        %491 = vmatpush1.xpose.msra.mxu0 0.0
        %492 = vmatprep.subr.mxu0 0.0
        %493 = vmatpush1.xpose.msra.mxu0 0.0
        %494 = vmatprep.subr.mxu0 0.0
        %495 = vmatpush1.xpose.msra.mxu0 0.0
        %496 = vmatprep.subr.mxu0 0.0
        %497 = vmatpush1.xpose.msra.mxu0 0.0
        %498 = vmatprep.subr.mxu0 0.0
        %499 = vmatpush1.xpose.msra.mxu0 0.0
        %500 = vmatprep.subr.mxu0 0.0
        %501 = vmatpush1.xpose.msra.mxu0 0.0
        %502 = vmatprep.subr.mxu0 0.0
        %503 = vmatpush1.xpose.msra.mxu0 0.0
        %504 = vmatprep.subr.mxu0 0.0
        %505 = vmatpush1.xpose.msra.mxu0 0.0
        %506 = vmatprep.subr.mxu0 0.0
        %507 = vmatpush1.xpose.msra.mxu0 0.0
        %508 = vmatprep.subr.mxu0 0.0
        %509 = vmatpush1.xpose.msra.mxu0 0.0
        %510 = vmatprep.subr.mxu0 0.0
        %511 = vmatpush1.xpose.msra.mxu0 0.0
        %512 = vmatprep.subr.mxu0 0.0
        %513 = vmatpush1.xpose.msra.mxu0 0.0
        %514 = vmatprep.mubr.f32.mxu0 0.0
        %515 = vmatmul.mubr.f32.gmra.mrb[0].mxu0 %v445
        %v516 = vpop.f32.mrb[0].mxu0
        %v517 = vadd.f32 0.0, %v516
        %v518 = vpop.f32.mrb[0].mxu0
        %519 = vdwg.mxu0
        %v521 = vsel %vm443, %v436, 0
        %v524 = vsel %vm443, %v440, 0
        %526 = vmatprep.subr.mxu0 0.0
        %527 = vmatpush1.xpose.msra.mxu0 %v524
        %528 = vmatprep.subr.mxu0 0.0
        %529 = vmatpush1.xpose.msra.mxu0 0.0
        %530 = vmatprep.subr.mxu0 0.0
        %531 = vmatpush1.xpose.msra.mxu0 0.0
        %532 = vmatprep.subr.mxu0 0.0
        %533 = vmatpush1.xpose.msra.mxu0 0.0
        %534 = vmatprep.subr.mxu0 0.0
        %535 = vmatpush1.xpose.msra.mxu0 0.0
        %536 = vmatprep.subr.mxu0 0.0
        %537 = vmatpush1.xpose.msra.mxu0 0.0
        %538 = vmatprep.subr.mxu0 0.0
        %539 = vmatpush1.xpose.msra.mxu0 0.0
        %540 = vmatprep.subr.mxu0 0.0
        %541 = vmatpush1.xpose.msra.mxu0 0.0
        %542 = vmatprep.subr.mxu0 0.0
        %543 = vmatpush1.xpose.msra.mxu0 0.0
        %544 = vmatprep.subr.mxu0 0.0
        %545 = vmatpush1.xpose.msra.mxu0 0.0
        %546 = vmatprep.subr.mxu0 0.0
        %547 = vmatpush1.xpose.msra.mxu0 0.0
        %548 = vmatprep.subr.mxu0 0.0
        %549 = vmatpush1.xpose.msra.mxu0 0.0
        %550 = vmatprep.subr.mxu0 0.0
        %551 = vmatpush1.xpose.msra.mxu0 0.0
        %552 = vmatprep.subr.mxu0 0.0
        %553 = vmatpush1.xpose.msra.mxu0 0.0
        %554 = vmatprep.subr.mxu0 0.0
        %555 = vmatpush1.xpose.msra.mxu0 0.0
        %556 = vmatprep.subr.mxu0 0.0
        %557 = vmatpush1.xpose.msra.mxu0 0.0
        %558 = vmatprep.subr.mxu0 0.0
        %559 = vmatpush1.xpose.msra.mxu0 0.0
        %560 = vmatprep.subr.mxu0 0.0
        %561 = vmatpush1.xpose.msra.mxu0 0.0
        %562 = vmatprep.subr.mxu0 0.0
        %563 = vmatpush1.xpose.msra.mxu0 0.0
        %564 = vmatprep.subr.mxu0 0.0
        %565 = vmatpush1.xpose.msra.mxu0 0.0
        %566 = vmatprep.subr.mxu0 0.0
        %567 = vmatpush1.xpose.msra.mxu0 0.0
        %568 = vmatprep.subr.mxu0 0.0
        %569 = vmatpush1.xpose.msra.mxu0 0.0
        %570 = vmatprep.subr.mxu0 0.0
        %571 = vmatpush1.xpose.msra.mxu0 0.0
        %572 = vmatprep.subr.mxu0 0.0
        %573 = vmatpush1.xpose.msra.mxu0 0.0
        %574 = vmatprep.subr.mxu0 0.0
        %575 = vmatpush1.xpose.msra.mxu0 0.0
        %576 = vmatprep.subr.mxu0 0.0
        %577 = vmatpush1.xpose.msra.mxu0 0.0
        %578 = vmatprep.subr.mxu0 0.0
        %579 = vmatpush1.xpose.msra.mxu0 0.0
        %580 = vmatprep.subr.mxu0 0.0
        %581 = vmatpush1.xpose.msra.mxu0 0.0
        %582 = vmatprep.subr.mxu0 0.0
        %583 = vmatpush1.xpose.msra.mxu0 0.0
        %584 = vmatprep.subr.mxu0 0.0
        %585 = vmatpush1.xpose.msra.mxu0 0.0
        %586 = vmatprep.subr.mxu0 0.0
        %587 = vmatpush1.xpose.msra.mxu0 0.0
        %588 = vmatprep.subr.mxu0 0.0
        %589 = vmatpush1.xpose.msra.mxu0 0.0
        %590 = vmatprep.mubr.f32.mxu0 0.0
        %591 = vmatmul.mubr.f32.gmra.mrb[0].mxu0 %v521
        %v592 = vpop.f32.mrb[0].mxu0
        %v593 = vadd.f32 0.0, %v592
        %v594 = vpop.f32.mrb[0].mxu0
        %595 = vdwg.mxu0
        %v597 = vsel %vm443, %v437, 0
        %v600 = vsel %vm443, %v441, 0
        %602 = vmatprep.subr.mxu0 0.0
        %603 = vmatpush1.xpose.msra.mxu0 %v600
        %604 = vmatprep.subr.mxu0 0.0
        %605 = vmatpush1.xpose.msra.mxu0 0.0
        %606 = vmatprep.subr.mxu0 0.0
        %607 = vmatpush1.xpose.msra.mxu0 0.0
        %608 = vmatprep.subr.mxu0 0.0
        %609 = vmatpush1.xpose.msra.mxu0 0.0
        %610 = vmatprep.subr.mxu0 0.0
        %611 = vmatpush1.xpose.msra.mxu0 0.0
        %612 = vmatprep.subr.mxu0 0.0
        %613 = vmatpush1.xpose.msra.mxu0 0.0
        %614 = vmatprep.subr.mxu0 0.0
        %615 = vmatpush1.xpose.msra.mxu0 0.0
        %616 = vmatprep.subr.mxu0 0.0
        %617 = vmatpush1.xpose.msra.mxu0 0.0
        %618 = vmatprep.subr.mxu0 0.0
        %619 = vmatpush1.xpose.msra.mxu0 0.0
        %620 = vmatprep.subr.mxu0 0.0
        %621 = vmatpush1.xpose.msra.mxu0 0.0
        %622 = vmatprep.subr.mxu0 0.0
        %623 = vmatpush1.xpose.msra.mxu0 0.0
        %624 = vmatprep.subr.mxu0 0.0
        %625 = vmatpush1.xpose.msra.mxu0 0.0
        %626 = vmatprep.subr.mxu0 0.0
        %627 = vmatpush1.xpose.msra.mxu0 0.0
        %628 = vmatprep.subr.mxu0 0.0
        %629 = vmatpush1.xpose.msra.mxu0 0.0
        %630 = vmatprep.subr.mxu0 0.0
        %631 = vmatpush1.xpose.msra.mxu0 0.0
        %632 = vmatprep.subr.mxu0 0.0
        %633 = vmatpush1.xpose.msra.mxu0 0.0
        %634 = vmatprep.subr.mxu0 0.0
        %635 = vmatpush1.xpose.msra.mxu0 0.0
        %636 = vmatprep.subr.mxu0 0.0
        %637 = vmatpush1.xpose.msra.mxu0 0.0
        %638 = vmatprep.subr.mxu0 0.0
        %639 = vmatpush1.xpose.msra.mxu0 0.0
        %640 = vmatprep.subr.mxu0 0.0
        %641 = vmatpush1.xpose.msra.mxu0 0.0
        %642 = vmatprep.subr.mxu0 0.0
        %643 = vmatpush1.xpose.msra.mxu0 0.0
        %644 = vmatprep.subr.mxu0 0.0
        %645 = vmatpush1.xpose.msra.mxu0 0.0
        %646 = vmatprep.subr.mxu0 0.0
        %647 = vmatpush1.xpose.msra.mxu0 0.0
        %648 = vmatprep.subr.mxu0 0.0
        %649 = vmatpush1.xpose.msra.mxu0 0.0
        %650 = vmatprep.subr.mxu0 0.0
        %651 = vmatpush1.xpose.msra.mxu0 0.0
        %652 = vmatprep.subr.mxu0 0.0
        %653 = vmatpush1.xpose.msra.mxu0 0.0
        %654 = vmatprep.subr.mxu0 0.0
        %655 = vmatpush1.xpose.msra.mxu0 0.0
        %656 = vmatprep.subr.mxu0 0.0
        %657 = vmatpush1.xpose.msra.mxu0 0.0
        %658 = vmatprep.subr.mxu0 0.0
        %659 = vmatpush1.xpose.msra.mxu0 0.0
        %660 = vmatprep.subr.mxu0 0.0
        %661 = vmatpush1.xpose.msra.mxu0 0.0
        %662 = vmatprep.subr.mxu0 0.0
        %663 = vmatpush1.xpose.msra.mxu0 0.0
        %664 = vmatprep.subr.mxu0 0.0
        %665 = vmatpush1.xpose.msra.mxu0 0.0
        %666 = vmatprep.mubr.f32.mxu0 0.0
        %667 = vmatmul.mubr.f32.gmra.mrb[0].mxu0 %v597
        %v668 = vpop.f32.mrb[0].mxu0
        %v669 = vadd.f32 0.0, %v668
        %v670 = vpop.f32.mrb[0].mxu0
        %671 = vdwg.mxu0
        %v673 = vsel %vm443, %v438, 0
        %v676 = vsel %vm443, %v442, 0
        %678 = vmatprep.subr.mxu0 0.0
        %679 = vmatpush1.xpose.msra.mxu0 %v676
        %680 = vmatprep.subr.mxu0 0.0
        %681 = vmatpush1.xpose.msra.mxu0 0.0
        %682 = vmatprep.subr.mxu0 0.0
        %683 = vmatpush1.xpose.msra.mxu0 0.0
        %684 = vmatprep.subr.mxu0 0.0
        %685 = vmatpush1.xpose.msra.mxu0 0.0
        %686 = vmatprep.subr.mxu0 0.0
        %687 = vmatpush1.xpose.msra.mxu0 0.0
        %688 = vmatprep.subr.mxu0 0.0
        %689 = vmatpush1.xpose.msra.mxu0 0.0
        %690 = vmatprep.subr.mxu0 0.0
        %691 = vmatpush1.xpose.msra.mxu0 0.0
        %692 = vmatprep.subr.mxu0 0.0
        %693 = vmatpush1.xpose.msra.mxu0 0.0
        %694 = vmatprep.subr.mxu0 0.0
        %695 = vmatpush1.xpose.msra.mxu0 0.0
        %696 = vmatprep.subr.mxu0 0.0
        %697 = vmatpush1.xpose.msra.mxu0 0.0
        %698 = vmatprep.subr.mxu0 0.0
        %699 = vmatpush1.xpose.msra.mxu0 0.0
        %700 = vmatprep.subr.mxu0 0.0
        %701 = vmatpush1.xpose.msra.mxu0 0.0
        %702 = vmatprep.subr.mxu0 0.0
        %703 = vmatpush1.xpose.msra.mxu0 0.0
        %704 = vmatprep.subr.mxu0 0.0
        %705 = vmatpush1.xpose.msra.mxu0 0.0
        %706 = vmatprep.subr.mxu0 0.0
        %707 = vmatpush1.xpose.msra.mxu0 0.0
        %708 = vmatprep.subr.mxu0 0.0
        %709 = vmatpush1.xpose.msra.mxu0 0.0
        %710 = vmatprep.subr.mxu0 0.0
        %711 = vmatpush1.xpose.msra.mxu0 0.0
        %712 = vmatprep.subr.mxu0 0.0
        %713 = vmatpush1.xpose.msra.mxu0 0.0
        %714 = vmatprep.subr.mxu0 0.0
        %715 = vmatpush1.xpose.msra.mxu0 0.0
        %716 = vmatprep.subr.mxu0 0.0
        %717 = vmatpush1.xpose.msra.mxu0 0.0
        %718 = vmatprep.subr.mxu0 0.0
        %719 = vmatpush1.xpose.msra.mxu0 0.0
        %720 = vmatprep.subr.mxu0 0.0
        %721 = vmatpush1.xpose.msra.mxu0 0.0
        %722 = vmatprep.subr.mxu0 0.0
        %723 = vmatpush1.xpose.msra.mxu0 0.0
        %724 = vmatprep.subr.mxu0 0.0
        %725 = vmatpush1.xpose.msra.mxu0 0.0
        %726 = vmatprep.subr.mxu0 0.0
        %727 = vmatpush1.xpose.msra.mxu0 0.0
        %728 = vmatprep.subr.mxu0 0.0
        %729 = vmatpush1.xpose.msra.mxu0 0.0
        %730 = vmatprep.subr.mxu0 0.0
        %731 = vmatpush1.xpose.msra.mxu0 0.0
        %732 = vmatprep.subr.mxu0 0.0
        %733 = vmatpush1.xpose.msra.mxu0 0.0
        %734 = vmatprep.subr.mxu0 0.0
        %735 = vmatpush1.xpose.msra.mxu0 0.0
        %736 = vmatprep.subr.mxu0 0.0
        %737 = vmatpush1.xpose.msra.mxu0 0.0
        %738 = vmatprep.subr.mxu0 0.0
        %739 = vmatpush1.xpose.msra.mxu0 0.0
        %740 = vmatprep.subr.mxu0 0.0
        %741 = vmatpush1.xpose.msra.mxu0 0.0
        %742 = vmatprep.mubr.f32.mxu0 0.0
        %743 = vmatmul.mubr.f32.gmra.mrb[0].mxu0 %v673
        %v744 = vpop.f32.mrb[0].mxu0
        %v745 = vadd.f32 0.0, %v744
        %v746 = vpop.f32.mrb[0].mxu0
        %747 = vdwg.mxu0
        %v748 = vld [vmem:[#allocation2] sm:$0xff]
        %v749 = vld [vmem:[#allocation2 + $0x8] sm:$0xff]
        %v750 = vld [vmem:[#allocation2 + $0x10] sm:$0xff]
        %v751 = vld [vmem:[#allocation2 + $0x18] sm:$0xff]
        %v752 = vsel %vm443, %v517, -inf
        %753 = vmax.xlane.f32.xlu0 %v752
        %v754 = vpop.xlane.xlu0 %753
        %v755 = vsel %vm443, %v593, -inf
        %756 = vmax.xlane.f32.xlu0 %v755
        %v757 = vpop.xlane.xlu0 %756
        %v758 = vsel %vm443, %v669, -inf
        %759 = vmax.xlane.f32.xlu0 %v758
        %v760 = vpop.xlane.xlu0 %759
        %v761 = vsel %vm443, %v745, -inf
        %762 = vmax.xlane.f32.xlu0 %v761
        %v763 = vpop.xlane.xlu0 %762
        %v764 = vmax.f32 %v748, %v754
        %v765 = vmax.f32 %v749, %v757
        %v766 = vmax.f32 %v750, %v760
        %v767 = vmax.f32 %v751, %v763
        %v768 = vsub.f32 %v748, %v764
        %v769 = vsub.f32 %v749, %v765
        %v770 = vsub.f32 %v750, %v766
        %v771 = vsub.f32 %v751, %v767
        %v772 = vmul.f32 %v768, 1.442695
        %v773 = vpow.pop %v772
        %v774 = vmul.f32 %v769, 1.442695
        %v775 = vpow.pop %v774
        %v776 = vmul.f32 %v770, 1.442695
        %v777 = vpow.pop %v776
        %v778 = vmul.f32 %v771, 1.442695
        %v779 = vpow.pop %v778
        %781 = vset.pattern.permute.xlu0 0
        %782 = vperm.xlu0 %781, %v764
        %v783 = vpop.permute.xlu0 %782
        %786 = vset.pattern.permute.xlu0 0
        %787 = vperm.xlu0 %786, %v765
        %v788 = vpop.permute.xlu0 %787
        %791 = vset.pattern.permute.xlu0 0
        %792 = vperm.xlu0 %791, %v766
        %v793 = vpop.permute.xlu0 %792
        %796 = vset.pattern.permute.xlu0 0
        %797 = vperm.xlu0 %796, %v767
        %v798 = vpop.permute.xlu0 %797
        %v800 = vsub.f32 %v517, %v783
        %v801 = vsub.f32 %v593, %v788
        %v802 = vsub.f32 %v669, %v793
        %v803 = vsub.f32 %v745, %v798
        %v804 = vmul.f32 %v800, 1.442695
        %v805 = vpow.pop %v804
        %v806 = vmul.f32 %v801, 1.442695
        %v807 = vpow.pop %v806
        %v808 = vmul.f32 %v802, 1.442695
        %v809 = vpow.pop %v808
        %v810 = vmul.f32 %v803, 1.442695
        %v811 = vpow.pop %v810
        %v812 = vld [vmem:[#allocation3] sm:$0xff]
        %v813 = vld [vmem:[#allocation3 + $0x8] sm:$0xff]
        %v814 = vld [vmem:[#allocation3 + $0x10] sm:$0xff]
        %v815 = vld [vmem:[#allocation3 + $0x18] sm:$0xff]
        %v816 = vmul.f32 %v773, %v812
        %v817 = vmul.f32 %v775, %v813
        %v818 = vmul.f32 %v777, %v814
        %v819 = vmul.f32 %v779, %v815
        %v820 = vsel %vm443, %v805, 0.0
        %821 = vadd.xlane.f32.xlu0 %v820
        %v822 = vpop.xlane.xlu0 %821
        %v823 = vsel %vm443, %v807, 0.0
        %824 = vadd.xlane.f32.xlu0 %v823
        %v825 = vpop.xlane.xlu0 %824
        %v826 = vsel %vm443, %v809, 0.0
        %827 = vadd.xlane.f32.xlu0 %v826
        %v828 = vpop.xlane.xlu0 %827
        %v829 = vsel %vm443, %v811, 0.0
        %830 = vadd.xlane.f32.xlu0 %v829
        %v831 = vpop.xlane.xlu0 %830
        %v832 = vadd.f32 %v816, %v822
        %v833 = vadd.f32 %v817, %v825
        %v834 = vadd.f32 %v818, %v828
        %v835 = vadd.f32 %v819, %v831
        %vm836 = vcmask 7168
        %837 = vst.msk [vmem:[#allocation3] sm:$0xff] %vm836, %v832
        %838 = vst.msk [vmem:[#allocation3 + $0x8] sm:$0xff] %vm836, %v833
        %839 = vst.msk [vmem:[#allocation3 + $0x10] sm:$0xff] %vm836, %v834
        %840 = vst.msk [vmem:[#allocation3 + $0x18] sm:$0xff] %vm836, %v835
        %v841 = vld [vmem:[#allocation4] sm:$0xff]
        %v842 = vld [vmem:[#allocation4 + $0x8] sm:$0xff]
        %v843 = vld [vmem:[#allocation4 + $0x10] sm:$0xff]
        %v844 = vld [vmem:[#allocation4 + $0x18] sm:$0xff]
        %846 = vset.pattern.permute.xlu0 0
        %847 = vperm.xlu0 %846, %v773
        %v848 = vpop.permute.xlu0 %847
        %851 = vset.pattern.permute.xlu0 0
        %852 = vperm.xlu0 %851, %v775
        %v853 = vpop.permute.xlu0 %852
        %856 = vset.pattern.permute.xlu0 0
        %857 = vperm.xlu0 %856, %v777
        %v858 = vpop.permute.xlu0 %857
        %861 = vset.pattern.permute.xlu0 0
        %862 = vperm.xlu0 %861, %v779
        %v863 = vpop.permute.xlu0 %862
        %v865 = vmul.f32 %v848, %v841
        %v866 = vmul.f32 %v853, %v842
        %v867 = vmul.f32 %v858, %v843
        %v868 = vmul.f32 %v863, %v844
        %v869 = vld [vmem:[%s365] sm:$0xff]
        %v870 = vld [vmem:[%s365 + $0x8] sm:$0xff]
        %v871 = vld [vmem:[%s365 + $0x10] sm:$0xff]
        %v872 = vld [vmem:[%s365 + $0x18] sm:$0xff]
        %v874 = vsel %vm443, %v805, 0
        %876 = vmatprep.subr.mxu0 0.0
        %877 = vmatpush1.msra.mxu0 %v869
        %878 = vmatprep.subr.mxu0 0.0
        %879 = vmatpush1.msra.mxu0 0.0
        %880 = vmatprep.subr.mxu0 0.0
        %881 = vmatpush1.msra.mxu0 0.0
        %882 = vmatprep.subr.mxu0 0.0
        %883 = vmatpush1.msra.mxu0 0.0
        %884 = vmatprep.subr.mxu0 0.0
        %885 = vmatpush1.msra.mxu0 0.0
        %886 = vmatprep.subr.mxu0 0.0
        %887 = vmatpush1.msra.mxu0 0.0
        %888 = vmatprep.subr.mxu0 0.0
        %889 = vmatpush1.msra.mxu0 0.0
        %890 = vmatprep.subr.mxu0 0.0
        %891 = vmatpush1.msra.mxu0 0.0
        %892 = vmatprep.subr.mxu0 0.0
        %893 = vmatpush1.msra.mxu0 0.0
        %894 = vmatprep.subr.mxu0 0.0
        %895 = vmatpush1.msra.mxu0 0.0
        %896 = vmatprep.subr.mxu0 0.0
        %897 = vmatpush1.msra.mxu0 0.0
        %898 = vmatprep.subr.mxu0 0.0
        %899 = vmatpush1.msra.mxu0 0.0
        %900 = vmatprep.subr.mxu0 0.0
        %901 = vmatpush1.msra.mxu0 0.0
        %902 = vmatprep.subr.mxu0 0.0
        %903 = vmatpush1.msra.mxu0 0.0
        %904 = vmatprep.subr.mxu0 0.0
        %905 = vmatpush1.msra.mxu0 0.0
        %906 = vmatprep.subr.mxu0 0.0
        %907 = vmatpush1.msra.mxu0 0.0
        %908 = vmatprep.subr.mxu0 0.0
        %909 = vmatpush1.msra.mxu0 0.0
        %910 = vmatprep.subr.mxu0 0.0
        %911 = vmatpush1.msra.mxu0 0.0
        %912 = vmatprep.subr.mxu0 0.0
        %913 = vmatpush1.msra.mxu0 0.0
        %914 = vmatprep.subr.mxu0 0.0
        %915 = vmatpush1.msra.mxu0 0.0
        %916 = vmatprep.subr.mxu0 0.0
        %917 = vmatpush1.msra.mxu0 0.0
        %918 = vmatprep.subr.mxu0 0.0
        %919 = vmatpush1.msra.mxu0 0.0
        %920 = vmatprep.subr.mxu0 0.0
        %921 = vmatpush1.msra.mxu0 0.0
        %922 = vmatprep.subr.mxu0 0.0
        %923 = vmatpush1.msra.mxu0 0.0
        %924 = vmatprep.subr.mxu0 0.0
        %925 = vmatpush1.msra.mxu0 0.0
        %926 = vmatprep.subr.mxu0 0.0
        %927 = vmatpush1.msra.mxu0 0.0
        %928 = vmatprep.subr.mxu0 0.0
        %929 = vmatpush1.msra.mxu0 0.0
        %930 = vmatprep.subr.mxu0 0.0
        %931 = vmatpush1.msra.mxu0 0.0
        %932 = vmatprep.subr.mxu0 0.0
        %933 = vmatpush1.msra.mxu0 0.0
        %934 = vmatprep.subr.mxu0 0.0
        %935 = vmatpush1.msra.mxu0 0.0
        %936 = vmatprep.subr.mxu0 0.0
        %937 = vmatpush1.msra.mxu0 0.0
        %938 = vmatprep.subr.mxu0 0.0
        %939 = vmatpush1.msra.mxu0 0.0
        %940 = vmatprep.mubr.f32.mxu0 0.0
        %941 = vmatmul.mubr.f32.gmra.mrb[0].mxu0 %v874
        %v942 = vpop.f32.mrb[0].mxu0
        %v943 = vadd.f32 0.0, %v942
        %v944 = vpop.f32.mrb[0].mxu0
        %945 = vdwg.mxu0
        %v947 = vsel %vm443, %v807, 0
        %949 = vmatprep.subr.mxu0 0.0
        %950 = vmatpush1.msra.mxu0 %v870
        %951 = vmatprep.subr.mxu0 0.0
        %952 = vmatpush1.msra.mxu0 0.0
        %953 = vmatprep.subr.mxu0 0.0
        %954 = vmatpush1.msra.mxu0 0.0
        %955 = vmatprep.subr.mxu0 0.0
        %956 = vmatpush1.msra.mxu0 0.0
        %957 = vmatprep.subr.mxu0 0.0
        %958 = vmatpush1.msra.mxu0 0.0
        %959 = vmatprep.subr.mxu0 0.0
        %960 = vmatpush1.msra.mxu0 0.0
        %961 = vmatprep.subr.mxu0 0.0
        %962 = vmatpush1.msra.mxu0 0.0
        %963 = vmatprep.subr.mxu0 0.0
        %964 = vmatpush1.msra.mxu0 0.0
        %965 = vmatprep.subr.mxu0 0.0
        %966 = vmatpush1.msra.mxu0 0.0
        %967 = vmatprep.subr.mxu0 0.0
        %968 = vmatpush1.msra.mxu0 0.0
        %969 = vmatprep.subr.mxu0 0.0
        %970 = vmatpush1.msra.mxu0 0.0
        %971 = vmatprep.subr.mxu0 0.0
        %972 = vmatpush1.msra.mxu0 0.0
        %973 = vmatprep.subr.mxu0 0.0
        %974 = vmatpush1.msra.mxu0 0.0
        %975 = vmatprep.subr.mxu0 0.0
        %976 = vmatpush1.msra.mxu0 0.0
        %977 = vmatprep.subr.mxu0 0.0
        %978 = vmatpush1.msra.mxu0 0.0
        %979 = vmatprep.subr.mxu0 0.0
        %980 = vmatpush1.msra.mxu0 0.0
        %981 = vmatprep.subr.mxu0 0.0
        %982 = vmatpush1.msra.mxu0 0.0
        %983 = vmatprep.subr.mxu0 0.0
        %984 = vmatpush1.msra.mxu0 0.0
        %985 = vmatprep.subr.mxu0 0.0
        %986 = vmatpush1.msra.mxu0 0.0
        %987 = vmatprep.subr.mxu0 0.0
        %988 = vmatpush1.msra.mxu0 0.0
        %989 = vmatprep.subr.mxu0 0.0
        %990 = vmatpush1.msra.mxu0 0.0
        %991 = vmatprep.subr.mxu0 0.0
        %992 = vmatpush1.msra.mxu0 0.0
        %993 = vmatprep.subr.mxu0 0.0
        %994 = vmatpush1.msra.mxu0 0.0
        %995 = vmatprep.subr.mxu0 0.0
        %996 = vmatpush1.msra.mxu0 0.0
        %997 = vmatprep.subr.mxu0 0.0
        %998 = vmatpush1.msra.mxu0 0.0
        %999 = vmatprep.subr.mxu0 0.0
        %1000 = vmatpush1.msra.mxu0 0.0
        %1001 = vmatprep.subr.mxu0 0.0
        %1002 = vmatpush1.msra.mxu0 0.0
        %1003 = vmatprep.subr.mxu0 0.0
        %1004 = vmatpush1.msra.mxu0 0.0
        %1005 = vmatprep.subr.mxu0 0.0
        %1006 = vmatpush1.msra.mxu0 0.0
        %1007 = vmatprep.subr.mxu0 0.0
        %1008 = vmatpush1.msra.mxu0 0.0
        %1009 = vmatprep.subr.mxu0 0.0
        %1010 = vmatpush1.msra.mxu0 0.0
        %1011 = vmatprep.subr.mxu0 0.0
        %1012 = vmatpush1.msra.mxu0 0.0
        %1013 = vmatprep.mubr.f32.mxu0 0.0
        %1014 = vmatmul.mubr.f32.gmra.mrb[0].mxu0 %v947
        %v1015 = vpop.f32.mrb[0].mxu0
        %v1016 = vadd.f32 0.0, %v1015
        %v1017 = vpop.f32.mrb[0].mxu0
        %1018 = vdwg.mxu0
        %v1020 = vsel %vm443, %v809, 0
        %1022 = vmatprep.subr.mxu0 0.0
        %1023 = vmatpush1.msra.mxu0 %v871
        %1024 = vmatprep.subr.mxu0 0.0
        %1025 = vmatpush1.msra.mxu0 0.0
        %1026 = vmatprep.subr.mxu0 0.0
        %1027 = vmatpush1.msra.mxu0 0.0
        %1028 = vmatprep.subr.mxu0 0.0
        %1029 = vmatpush1.msra.mxu0 0.0
        %1030 = vmatprep.subr.mxu0 0.0
        %1031 = vmatpush1.msra.mxu0 0.0
        %1032 = vmatprep.subr.mxu0 0.0
        %1033 = vmatpush1.msra.mxu0 0.0
        %1034 = vmatprep.subr.mxu0 0.0
        %1035 = vmatpush1.msra.mxu0 0.0
        %1036 = vmatprep.subr.mxu0 0.0
        %1037 = vmatpush1.msra.mxu0 0.0
        %1038 = vmatprep.subr.mxu0 0.0
        %1039 = vmatpush1.msra.mxu0 0.0
        %1040 = vmatprep.subr.mxu0 0.0
        %1041 = vmatpush1.msra.mxu0 0.0
        %1042 = vmatprep.subr.mxu0 0.0
        %1043 = vmatpush1.msra.mxu0 0.0
        %1044 = vmatprep.subr.mxu0 0.0
        %1045 = vmatpush1.msra.mxu0 0.0
        %1046 = vmatprep.subr.mxu0 0.0
        %1047 = vmatpush1.msra.mxu0 0.0
        %1048 = vmatprep.subr.mxu0 0.0
        %1049 = vmatpush1.msra.mxu0 0.0
        %1050 = vmatprep.subr.mxu0 0.0
        %1051 = vmatpush1.msra.mxu0 0.0
        %1052 = vmatprep.subr.mxu0 0.0
        %1053 = vmatpush1.msra.mxu0 0.0
        %1054 = vmatprep.subr.mxu0 0.0
        %1055 = vmatpush1.msra.mxu0 0.0
        %1056 = vmatprep.subr.mxu0 0.0
        %1057 = vmatpush1.msra.mxu0 0.0
        %1058 = vmatprep.subr.mxu0 0.0
        %1059 = vmatpush1.msra.mxu0 0.0
        %1060 = vmatprep.subr.mxu0 0.0
        %1061 = vmatpush1.msra.mxu0 0.0
        %1062 = vmatprep.subr.mxu0 0.0
        %1063 = vmatpush1.msra.mxu0 0.0
        %1064 = vmatprep.subr.mxu0 0.0
        %1065 = vmatpush1.msra.mxu0 0.0
        %1066 = vmatprep.subr.mxu0 0.0
        %1067 = vmatpush1.msra.mxu0 0.0
        %1068 = vmatprep.subr.mxu0 0.0
        %1069 = vmatpush1.msra.mxu0 0.0
        %1070 = vmatprep.subr.mxu0 0.0
        %1071 = vmatpush1.msra.mxu0 0.0
        %1072 = vmatprep.subr.mxu0 0.0
        %1073 = vmatpush1.msra.mxu0 0.0
        %1074 = vmatprep.subr.mxu0 0.0
        %1075 = vmatpush1.msra.mxu0 0.0
        %1076 = vmatprep.subr.mxu0 0.0
        %1077 = vmatpush1.msra.mxu0 0.0
        %1078 = vmatprep.subr.mxu0 0.0
        %1079 = vmatpush1.msra.mxu0 0.0
        %1080 = vmatprep.subr.mxu0 0.0
        %1081 = vmatpush1.msra.mxu0 0.0
        %1082 = vmatprep.subr.mxu0 0.0
        %1083 = vmatpush1.msra.mxu0 0.0
        %1084 = vmatprep.subr.mxu0 0.0
        %1085 = vmatpush1.msra.mxu0 0.0
        %1086 = vmatprep.mubr.f32.mxu0 0.0
        %1087 = vmatmul.mubr.f32.gmra.mrb[0].mxu0 %v1020
        %v1088 = vpop.f32.mrb[0].mxu0
        %v1089 = vadd.f32 0.0, %v1088
        %v1090 = vpop.f32.mrb[0].mxu0
        %1091 = vdwg.mxu0
        %v1093 = vsel %vm443, %v811, 0
        %1095 = vmatprep.subr.mxu0 0.0
        %1096 = vmatpush1.msra.mxu0 %v872
        %1097 = vmatprep.subr.mxu0 0.0
        %1098 = vmatpush1.msra.mxu0 0.0
        %1099 = vmatprep.subr.mxu0 0.0
        %1100 = vmatpush1.msra.mxu0 0.0
        %1101 = vmatprep.subr.mxu0 0.0
        %1102 = vmatpush1.msra.mxu0 0.0
        %1103 = vmatprep.subr.mxu0 0.0
        %1104 = vmatpush1.msra.mxu0 0.0
        %1105 = vmatprep.subr.mxu0 0.0
        %1106 = vmatpush1.msra.mxu0 0.0
        %1107 = vmatprep.subr.mxu0 0.0
        %1108 = vmatpush1.msra.mxu0 0.0
        %1109 = vmatprep.subr.mxu0 0.0
        %1110 = vmatpush1.msra.mxu0 0.0
        %1111 = vmatprep.subr.mxu0 0.0
        %1112 = vmatpush1.msra.mxu0 0.0
        %1113 = vmatprep.subr.mxu0 0.0
        %1114 = vmatpush1.msra.mxu0 0.0
        %1115 = vmatprep.subr.mxu0 0.0
        %1116 = vmatpush1.msra.mxu0 0.0
        %1117 = vmatprep.subr.mxu0 0.0
        %1118 = vmatpush1.msra.mxu0 0.0
        %1119 = vmatprep.subr.mxu0 0.0
        %1120 = vmatpush1.msra.mxu0 0.0
        %1121 = vmatprep.subr.mxu0 0.0
        %1122 = vmatpush1.msra.mxu0 0.0
        %1123 = vmatprep.subr.mxu0 0.0
        %1124 = vmatpush1.msra.mxu0 0.0
        %1125 = vmatprep.subr.mxu0 0.0
        %1126 = vmatpush1.msra.mxu0 0.0
        %1127 = vmatprep.subr.mxu0 0.0
        %1128 = vmatpush1.msra.mxu0 0.0
        %1129 = vmatprep.subr.mxu0 0.0
        %1130 = vmatpush1.msra.mxu0 0.0
        %1131 = vmatprep.subr.mxu0 0.0
        %1132 = vmatpush1.msra.mxu0 0.0
        %1133 = vmatprep.subr.mxu0 0.0
        %1134 = vmatpush1.msra.mxu0 0.0
        %1135 = vmatprep.subr.mxu0 0.0
        %1136 = vmatpush1.msra.mxu0 0.0
        %1137 = vmatprep.subr.mxu0 0.0
        %1138 = vmatpush1.msra.mxu0 0.0
        %1139 = vmatprep.subr.mxu0 0.0
        %1140 = vmatpush1.msra.mxu0 0.0
        %1141 = vmatprep.subr.mxu0 0.0
        %1142 = vmatpush1.msra.mxu0 0.0
        %1143 = vmatprep.subr.mxu0 0.0
        %1144 = vmatpush1.msra.mxu0 0.0
        %1145 = vmatprep.subr.mxu0 0.0
        %1146 = vmatpush1.msra.mxu0 0.0
        %1147 = vmatprep.subr.mxu0 0.0
        %1148 = vmatpush1.msra.mxu0 0.0
        %1149 = vmatprep.subr.mxu0 0.0
        %1150 = vmatpush1.msra.mxu0 0.0
        %1151 = vmatprep.subr.mxu0 0.0
        %1152 = vmatpush1.msra.mxu0 0.0
        %1153 = vmatprep.subr.mxu0 0.0
        %1154 = vmatpush1.msra.mxu0 0.0
        %1155 = vmatprep.subr.mxu0 0.0
        %1156 = vmatpush1.msra.mxu0 0.0
        %1157 = vmatprep.subr.mxu0 0.0
        %1158 = vmatpush1.msra.mxu0 0.0
        %1159 = vmatprep.mubr.f32.mxu0 0.0
        %1160 = vmatmul.mubr.f32.gmra.mrb[0].mxu0 %v1093
        %v1161 = vpop.f32.mrb[0].mxu0
        %v1162 = vadd.f32 0.0, %v1161
        %v1163 = vpop.f32.mrb[0].mxu0
        %1164 = vdwg.mxu0
        %v1165 = vadd.f32 %v865, %v943
        %v1166 = vadd.f32 %v866, %v1016
        %v1167 = vadd.f32 %v867, %v1089
        %v1168 = vadd.f32 %v868, %v1162
        %1169 = vst.msk [vmem:[#allocation4] sm:$0xff] %vm443, %v1165
        %1170 = vst.msk [vmem:[#allocation4 + $0x8] sm:$0xff] %vm443, %v1166
        %1171 = vst.msk [vmem:[#allocation4 + $0x10] sm:$0xff] %vm443, %v1167
        %1172 = vst.msk [vmem:[#allocation4 + $0x18] sm:$0xff] %vm443, %v1168
        %1173 = vst.msk [vmem:[#allocation2] sm:$0xff] %vm836, %v764
        %1174 = vst.msk [vmem:[#allocation2 + $0x8] sm:$0xff] %vm836, %v765
        %1175 = vst.msk [vmem:[#allocation2 + $0x10] sm:$0xff] %vm836, %v766
        %1176 = vst.msk [vmem:[#allocation2 + $0x18] sm:$0xff] %vm836, %v767
        %s1177 = smul.u32 %s38, 32
        %s1178 = scalar_lea.vmem [#allocation5], %s1177
        %1179 = vst.msk [vmem:[%s1178] sm:$0xff] %vm443, %v805
        %1180 = vst.msk [vmem:[%s1178 + $0x8] sm:$0xff] %vm443, %v807
        %1181 = vst.msk [vmem:[%s1178 + $0x10] sm:$0xff] %vm443, %v809
        %1182 = vst.msk [vmem:[%s1178 + $0x18] sm:$0xff] %vm443, %v811
        %s1183 = scalar_lea.vmem [#allocation6], %s1177
        %1184 = vst.msk [vmem:[%s1183] sm:$0xff] %vm836, %v764
        %1185 = vst.msk [vmem:[%s1183 + $0x8] sm:$0xff] %vm836, %v765
        %1186 = vst.msk [vmem:[%s1183 + $0x10] sm:$0xff] %vm836, %v766
        %1187 = vst.msk [vmem:[%s1183 + $0x18] sm:$0xff] %vm836, %v767
        %p1188 = scmp.eq.s32.totalorder %s38, 1
        // Predicated region
        $region65: #{tpu_custom_call.1} parent=39 // pred_check
          %p1189 = pneg %p1188
        $region66: #{tpu_custom_call.1} parent=39 // pred_check_branch
          %1191 = sbr.rel (%p1189) target = $region68
        $region67: #{tpu_custom_call.1} parent=39 // pred_region
          %v1192 = vld [vmem:[#allocation3] sm:$0xff]
          %v1193 = vld [vmem:[#allocation3 + $0x8] sm:$0xff]
          %v1194 = vld [vmem:[#allocation3 + $0x10] sm:$0xff]
          %v1195 = vld [vmem:[#allocation3 + $0x18] sm:$0xff]
          %v1196 = vrcp.pop %v1192
          %v1197 = vrcp.pop %v1193
          %v1198 = vrcp.pop %v1194
          %v1199 = vrcp.pop %v1195
          %v1200 = vmul.f32 %v1192, %v1196
          %v1201 = vmul.f32 %v1193, %v1197
          %v1202 = vmul.f32 %v1194, %v1198
          %v1203 = vmul.f32 %v1195, %v1199
          %v1204 = vsub.f32 2.0, %v1200
          %v1205 = vsub.f32 2.0, %v1201
          %v1206 = vsub.f32 2.0, %v1202
          %v1207 = vsub.f32 2.0, %v1203
          %v1208 = vmul.f32 %v1196, %v1204
          %v1209 = vmul.f32 %v1197, %v1205
          %v1210 = vmul.f32 %v1198, %v1206
          %v1211 = vmul.f32 %v1199, %v1207
          %v1212 = vld [vmem:[#allocation4] sm:$0xff]
          %v1213 = vld [vmem:[#allocation4 + $0x8] sm:$0xff]
          %v1214 = vld [vmem:[#allocation4 + $0x10] sm:$0xff]
          %v1215 = vld [vmem:[#allocation4 + $0x18] sm:$0xff]
          %1217 = vset.pattern.permute.xlu0 0
          %1218 = vperm.xlu0 %1217, %v1208
          %v1219 = vpop.permute.xlu0 %1218
          %1222 = vset.pattern.permute.xlu0 0
          %1223 = vperm.xlu0 %1222, %v1209
          %v1224 = vpop.permute.xlu0 %1223
          %1227 = vset.pattern.permute.xlu0 0
          %1228 = vperm.xlu0 %1227, %v1210
          %v1229 = vpop.permute.xlu0 %1228
          %1232 = vset.pattern.permute.xlu0 0
          %1233 = vperm.xlu0 %1232, %v1211
          %v1234 = vpop.permute.xlu0 %1233
          %v1236 = vmul.f32 %v1212, %v1219
          %v1237 = vmul.f32 %v1213, %v1224
          %v1238 = vmul.f32 %v1214, %v1229
          %v1239 = vmul.f32 %v1215, %v1234
          %1241 = vrot.lane.b32.xlu0 %v1237, 8
          %v1242 = vpop.permute.xlu0 %1241
          %1245 = vrot.lane.b32.xlu0 %v1238, 16
          %v1246 = vpop.permute.xlu0 %1245
          %1249 = vrot.lane.b32.xlu0 %v1239, 24
          %v1250 = vpop.permute.xlu0 %1249
          %v1252 = vsel %vm443, %v1236, %v1242
          %vm1253 = vcmask 130048
          %v1254 = vsel %vm1253, %v1252, %v1246
          %vm1255 = vcmask 195584
          %v1256 = vsel %vm1255, %v1254, %v1250
          %v1257 = vld [vmem:[#allocation13] sm:$0xff]
          %v1258 = vld [vmem:[#allocation13 + $0x8] sm:$0xff]
          %v1259 = vld [vmem:[#allocation13 + $0x10] sm:$0xff]
          %v1260 = vld [vmem:[#allocation13 + $0x18] sm:$0xff]
          %v1261 = vld [vmem:[#allocation15] sm:$0x1]
          %v1263 = vlaneseq
          %v1264 = vshrl.u32 %v1263, 7
          %v1265 = vsub.s32 0, %v1264
          %v1266 = vrot.slane %v1261, %v1265
          %vm1268 = vcmask 261120
          %v1270 = vsel %vm1268, %v1256, 0
          %1272 = vmatprep.subr.mxu0 0.0
          %1273 = vmatpush1.msra.mxu0 %v1257
          %1274 = vmatprep.subr.mxu0 0.0
          %1275 = vmatpush1.msra.mxu0 %v1258
          %1276 = vmatprep.subr.mxu0 0.0
          %1277 = vmatpush1.msra.mxu0 %v1259
          %1278 = vmatprep.subr.mxu0 0.0
          %1279 = vmatpush1.msra.mxu0 %v1260
          %1280 = vmatprep.subr.mxu0 0.0
          %1281 = vmatpush1.msra.mxu0 0.0
          %1282 = vmatprep.subr.mxu0 0.0
          %1283 = vmatpush1.msra.mxu0 0.0
          %1284 = vmatprep.subr.mxu0 0.0
          %1285 = vmatpush1.msra.mxu0 0.0
          %1286 = vmatprep.subr.mxu0 0.0
          %1287 = vmatpush1.msra.mxu0 0.0
          %1288 = vmatprep.subr.mxu0 0.0
          %1289 = vmatpush1.msra.mxu0 0.0
          %1290 = vmatprep.subr.mxu0 0.0
          %1291 = vmatpush1.msra.mxu0 0.0
          %1292 = vmatprep.subr.mxu0 0.0
          %1293 = vmatpush1.msra.mxu0 0.0
          %1294 = vmatprep.subr.mxu0 0.0
          %1295 = vmatpush1.msra.mxu0 0.0
          %1296 = vmatprep.subr.mxu0 0.0
          %1297 = vmatpush1.msra.mxu0 0.0
          %1298 = vmatprep.subr.mxu0 0.0
          %1299 = vmatpush1.msra.mxu0 0.0
          %1300 = vmatprep.subr.mxu0 0.0
          %1301 = vmatpush1.msra.mxu0 0.0
          %1302 = vmatprep.subr.mxu0 0.0
          %1303 = vmatpush1.msra.mxu0 0.0
          %1304 = vmatprep.subr.mxu0 0.0
          %1305 = vmatpush1.msra.mxu0 0.0
          %1306 = vmatprep.subr.mxu0 0.0
          %1307 = vmatpush1.msra.mxu0 0.0
          %1308 = vmatprep.subr.mxu0 0.0
          %1309 = vmatpush1.msra.mxu0 0.0
          %1310 = vmatprep.subr.mxu0 0.0
          %1311 = vmatpush1.msra.mxu0 0.0
          %1312 = vmatprep.subr.mxu0 0.0
          %1313 = vmatpush1.msra.mxu0 0.0
          %1314 = vmatprep.subr.mxu0 0.0
          %1315 = vmatpush1.msra.mxu0 0.0
          %1316 = vmatprep.subr.mxu0 0.0
          %1317 = vmatpush1.msra.mxu0 0.0
          %1318 = vmatprep.subr.mxu0 0.0
          %1319 = vmatpush1.msra.mxu0 0.0
          %1320 = vmatprep.subr.mxu0 0.0
          %1321 = vmatpush1.msra.mxu0 0.0
          %1322 = vmatprep.subr.mxu0 0.0
          %1323 = vmatpush1.msra.mxu0 0.0
          %1324 = vmatprep.subr.mxu0 0.0
          %1325 = vmatpush1.msra.mxu0 0.0
          %1326 = vmatprep.subr.mxu0 0.0
          %1327 = vmatpush1.msra.mxu0 0.0
          %1328 = vmatprep.subr.mxu0 0.0
          %1329 = vmatpush1.msra.mxu0 0.0
          %1330 = vmatprep.subr.mxu0 0.0
          %1331 = vmatpush1.msra.mxu0 0.0
          %1332 = vmatprep.subr.mxu0 0.0
          %1333 = vmatpush1.msra.mxu0 0.0
          %1334 = vmatprep.subr.mxu0 0.0
          %1335 = vmatpush1.msra.mxu0 0.0
          %1336 = vmatprep.mubr.f32.mxu0 0.0
          %1337 = vmatmul.mubr.f32.gmra.mrb[0].mxu0 %v1270
          %v1338 = vpop.f32.mrb[0].mxu0
          %v1339 = vadd.f32 %v1266, %v1338
          %v1340 = vpop.f32.mrb[0].mxu0
          %1341 = vdwg.mxu0
          %1342 = vst.msk [vmem:[%s409] sm:$0xff] %vm1268, %v1339
          %v1343 = vld [vmem:[#allocation2] sm:$0xff]
          %v1344 = vld [vmem:[#allocation2 + $0x8] sm:$0xff]
          %v1345 = vld [vmem:[#allocation2 + $0x10] sm:$0xff]
          %v1346 = vld [vmem:[#allocation2 + $0x18] sm:$0xff]
          %v1347 = vld [vmem:[#allocation6] sm:$0xff]
          %v1348 = vld [vmem:[#allocation6 + $0x8] sm:$0xff]
          %v1349 = vld [vmem:[#allocation6 + $0x10] sm:$0xff]
          %v1350 = vld [vmem:[#allocation6 + $0x18] sm:$0xff]
          %v1351 = vsub.f32 %v1347, %v1343
          %v1352 = vsub.f32 %v1348, %v1344
          %v1353 = vsub.f32 %v1349, %v1345
          %v1354 = vsub.f32 %v1350, %v1346
          %v1355 = vmul.f32 %v1351, 1.442695
          %v1356 = vpow.pop %v1355
          %v1357 = vmul.f32 %v1352, 1.442695
          %v1358 = vpow.pop %v1357
          %v1359 = vmul.f32 %v1353, 1.442695
          %v1360 = vpow.pop %v1359
          %v1361 = vmul.f32 %v1354, 1.442695
          %v1362 = vpow.pop %v1361
          %v1363 = vmul.f32 %v1356, %v1208
          %v1364 = vmul.f32 %v1358, %v1209
          %v1365 = vmul.f32 %v1360, %v1210
          %v1366 = vmul.f32 %v1362, %v1211
          %v1367 = vld [vmem:[#allocation5] sm:$0xff]
          %v1368 = vld [vmem:[#allocation5 + $0x8] sm:$0xff]
          %v1369 = vld [vmem:[#allocation5 + $0x10] sm:$0xff]
          %v1370 = vld [vmem:[#allocation5 + $0x18] sm:$0xff]
          %1372 = vset.pattern.permute.xlu0 0
          %1373 = vperm.xlu0 %1372, %v1363
          %v1374 = vpop.permute.xlu0 %1373
          %1377 = vset.pattern.permute.xlu0 0
          %1378 = vperm.xlu0 %1377, %v1364
          %v1379 = vpop.permute.xlu0 %1378
          %1382 = vset.pattern.permute.xlu0 0
          %1383 = vperm.xlu0 %1382, %v1365
          %v1384 = vpop.permute.xlu0 %1383
          %1387 = vset.pattern.permute.xlu0 0
          %1388 = vperm.xlu0 %1387, %v1366
          %v1389 = vpop.permute.xlu0 %1388
          %v1391 = vmul.f32 %v1367, %v1374
          %v1392 = vmul.f32 %v1368, %v1379
          %v1393 = vmul.f32 %v1369, %v1384
          %v1394 = vmul.f32 %v1370, %v1389
          %v1395 = vsel %vm443, %v1391, 0.0
          %v1396 = vsel %vm443, %v1392, 0.0
          %v1397 = vadd.f32 %v1395, %v1396
          %v1398 = vsel %vm443, %v1393, 0.0
          %v1399 = vadd.f32 %v1397, %v1398
          %v1400 = vsel %vm443, %v1394, 0.0
          %v1401 = vadd.f32 %v1399, %v1400
          %v1402 = vmul.f32 %v1401, 0.25
          %1403 = vst.msk [vmem:[%s416] sm:$0xff] %vm443, %v1402
          %s1404 = scalar_lea.vmem [#allocation6], 32
          %v1405 = vld [vmem:[%s1404] sm:$0xff]
          %v1406 = vld [vmem:[%s1404 + $0x8] sm:$0xff]
          %v1407 = vld [vmem:[%s1404 + $0x10] sm:$0xff]
          %v1408 = vld [vmem:[%s1404 + $0x18] sm:$0xff]
          %v1409 = vsub.f32 %v1405, %v1343
          %v1410 = vsub.f32 %v1406, %v1344
          %v1411 = vsub.f32 %v1407, %v1345
          %v1412 = vsub.f32 %v1408, %v1346
          %v1413 = vmul.f32 %v1409, 1.442695
          %v1414 = vpow.pop %v1413
          %v1415 = vmul.f32 %v1410, 1.442695
          %v1416 = vpow.pop %v1415
          %v1417 = vmul.f32 %v1411, 1.442695
          %v1418 = vpow.pop %v1417
          %v1419 = vmul.f32 %v1412, 1.442695
          %v1420 = vpow.pop %v1419
          %v1421 = vmul.f32 %v1414, %v1208
          %v1422 = vmul.f32 %v1416, %v1209
          %v1423 = vmul.f32 %v1418, %v1210
          %v1424 = vmul.f32 %v1420, %v1211
          %s1425 = scalar_lea.vmem [#allocation5], 32
          %v1426 = vld [vmem:[%s1425] sm:$0xff]
          %v1427 = vld [vmem:[%s1425 + $0x8] sm:$0xff]
          %v1428 = vld [vmem:[%s1425 + $0x10] sm:$0xff]
          %v1429 = vld [vmem:[%s1425 + $0x18] sm:$0xff]
          %1431 = vset.pattern.permute.xlu0 0
          %1432 = vperm.xlu0 %1431, %v1421
          %v1433 = vpop.permute.xlu0 %1432
          %1436 = vset.pattern.permute.xlu0 0
          %1437 = vperm.xlu0 %1436, %v1422
          %v1438 = vpop.permute.xlu0 %1437
          %1441 = vset.pattern.permute.xlu0 0
          %1442 = vperm.xlu0 %1441, %v1423
          %v1443 = vpop.permute.xlu0 %1442
          %1446 = vset.pattern.permute.xlu0 0
          %1447 = vperm.xlu0 %1446, %v1424
          %v1448 = vpop.permute.xlu0 %1447
          %v1450 = vmul.f32 %v1426, %v1433
          %v1451 = vmul.f32 %v1427, %v1438
          %v1452 = vmul.f32 %v1428, %v1443
          %v1453 = vmul.f32 %v1429, %v1448
          %v1454 = vsel %vm443, %v1450, 0.0
          %v1455 = vsel %vm443, %v1451, 0.0
          %v1456 = vadd.f32 %v1454, %v1455
          %v1457 = vsel %vm443, %v1452, 0.0
          %v1458 = vadd.f32 %v1456, %v1457
          %v1459 = vsel %vm443, %v1453, 0.0
          %v1460 = vadd.f32 %v1458, %v1459
          %v1461 = vmul.f32 %v1460, 0.25
          %1463 = vrot.lane.b32.xlu0 %v1461, 8
          %v1464 = vpop.permute.xlu0 %1463
          %vm1466 = vcmask 130112
          %1467 = vst.msk [vmem:[%s416] sm:$0xff] %vm1466, %v1464
        $region68: #{tpu_custom_call.1} parent=39 // pred_fallthru
          _
        %s1468 = sand.u32 %s186, 1
        %s1469 = scalar_lea.sflag [#allocation9], %s1468
        %s1470 = sand.u32 %s186, 1
        %s1471 = smul.addr %s1470, 8
        %s1472 = scalar_lea.vmem [#allocation16], %s1471
        %s1473 = sand.u32 %s214, 1
        %s1474 = scalar_lea.sflag [#allocation18], %s1473
        %s1475 = sand.u32 %s214, 1
        %s1476 = smul.addr %s1475, 8
        %s1477 = scalar_lea.vmem [#allocation17], %s1476
        // Predicated region
        $region69: #{tpu_custom_call.1} parent=39 // pred_check
          %p1478 = pneg %p196
        $region70: #{tpu_custom_call.1} parent=39 // pred_check_branch
          %1480 = sbr.rel (%p1478) target = $region72
        $region71: #{tpu_custom_call.1} parent=39 // pred_region
          %s1482 = ssub.s32 128, 128
          %1483 = vsyncadd %s1469, %s1482
          %s1484 = smul.addr %s36, 2
          %s1485 = sadd.s32 %s37, %s1484
          %s1486 = smul.addr %s1485, 128
          %s1487 = scalar_lea.hbm %s5, %s1486
          %s1489 = sshll.u32 %s1472, 4
          %s1490 = int_to_ptr.vmem [resolvable:$true] %s1489
          %1492 = dma.vmem_to_hbm [thread:$0]  %s1490, 128, %s1487, %s1469
        $region72: #{tpu_custom_call.1} parent=39 // pred_fallthru
          _
        // Predicated region
        $region73: #{tpu_custom_call.1} parent=39 // pred_check
          %p1493 = pneg %p224
        $region74: #{tpu_custom_call.1} parent=39 // pred_check_branch
          %1495 = sbr.rel (%p1493) target = $region76
        $region75: #{tpu_custom_call.1} parent=39 // pred_region
          %s1497 = ssub.s32 128, 128
          %1498 = vsyncadd %s1474, %s1497
          %s1499 = smul.addr %s36, 2
          %s1500 = sadd.s32 %s37, %s1499
          %s1501 = smul.addr %s1500, 128
          %s1502 = scalar_lea.hbm %s6, %s1501
          %s1504 = sshll.u32 %s1477, 4
          %s1505 = int_to_ptr.vmem [resolvable:$true] %s1504
          %1507 = dma.vmem_to_hbm [thread:$0]  %s1505, 128, %s1502, %s1474
        $region76: #{tpu_custom_call.1} parent=39 // pred_fallthru
          _
      $region40: #{tpu_custom_call.1} parent=5 // pred_fallthru
        _
      %p1508 = scmp.le.s32.totalorder 2, %s26
      // Predicated region
      $region77: #{tpu_custom_call.1} parent=5 // pred_check
        %p1509 = pneg %p1508
      $region78: #{tpu_custom_call.1} parent=5 // pred_check_branch
        %1511 = sbr.rel (%p1509) target = $region80
      $region79: #{tpu_custom_call.1} parent=5 // pred_region
        %s1512 = ssub.s32 %s26, 2
        // Predicated region
        $region81: #{tpu_custom_call.1} parent=79 // pred_check
          %p1513 = pneg %p202
        $region82: #{tpu_custom_call.1} parent=79 // pred_check_branch
          %1515 = sbr.rel (%p1513) target = $region84
        $region83: #{tpu_custom_call.1} parent=79 // pred_region
          %s1516 = sand.u32 %s187, 1
          %s1517 = scalar_lea.sflag [#allocation9], %s1516
          %s1518 = sand.u32 %s187, 1
          %s1519 = smul.addr %s1518, 8
          %s1520 = scalar_lea.vmem [#allocation16], %s1519
          %1521 = dma.done %s1517, 128
        $region84: #{tpu_custom_call.1} parent=79 // pred_fallthru
          _
        // Predicated region
        $region85: #{tpu_custom_call.1} parent=79 // pred_check
          %p1522 = pneg %p230
        $region86: #{tpu_custom_call.1} parent=79 // pred_check_branch
          %1524 = sbr.rel (%p1522) target = $region88
        $region87: #{tpu_custom_call.1} parent=79 // pred_region
          %s1525 = sand.u32 %s215, 1
          %s1526 = scalar_lea.sflag [#allocation18], %s1525
          %s1527 = sand.u32 %s215, 1
          %s1528 = smul.addr %s1527, 8
          %s1529 = scalar_lea.vmem [#allocation17], %s1528
          %1530 = dma.done %s1526, 128
        $region88: #{tpu_custom_call.1} parent=79 // pred_fallthru
          _
      $region80: #{tpu_custom_call.1} parent=5 // pred_fallthru
        _
    $region6: #{tpu_custom_call.1} parent=1 // loop_footer
      %s30 = sadd.s32 1, %s26
    $region7: #{tpu_custom_call.1} parent=1 // loop_footer_branch
      %25 = sbr.rel target = $region3
    $region8: #{tpu_custom_call.1} parent=1 // loop_exit
      _
    %1531 = vsyncpa [#allocation8], 1
    %s1532 = scalar_lea.sflag [#allocation8], 1
    %1533 = vsyncpa %s1532, 1
    %1534 = vsyncpa [#allocation11], 1
    %s1535 = scalar_lea.sflag [#allocation11], 1
    %1536 = vsyncpa %s1535, 1
    %1537 = vsyncpa [#allocation14], 1
    %1538 = vsyncpa [#allocation9], 1
    %s1539 = scalar_lea.sflag [#allocation9], 1
    %1540 = vsyncpa %s1539, 1
    %1541 = vsyncpa [#allocation18], 1
    %s1542 = scalar_lea.sflag [#allocation18], 1
    %1543 = vsyncpa %s1542, 1

</llo_original>
